<compile_context>
chip_gen: v5e
topology: v5e:2x2
jax: 0.10.0
libtpu: 0.0.40
codegen_flags: <defaults>
</compile_context>

<pallas_src>
import functools
import math

import jax
import jax.numpy as jnp
from jax.experimental import pallas as pl
from jax.experimental.pallas import tpu as pltpu

_VMEM_LIMIT = 48 * 1024 * 1024  # safe on v5e/v6e (128 MiB) and v7x (64 MiB) alike


def _round_up(x, m):
    return ((x + m - 1) // m) * m


def _pad2(a, rows, cols):
    r, c = a.shape
    if r == rows and c == cols:
        return a
    return jnp.pad(a, ((0, rows - r), (0, cols - c)))


def _gelu(x):
    # tanh approximation of GELU (reference BERT uses erf-GELU; ~1e-3 close)
    return 0.5 * x * (1.0 + jnp.tanh(0.7978845608028654 * (x + 0.044715 * x * x * x)))


# ----------------------------- Pallas kernels ------------------------------

def _linear_kernel(x_ref, w_ref, b_ref, o_ref, acc_ref, *, act):
    # x: (tm, tk) bf16, w: (tk, tn) bf16, b: (1, tn) f32, acc: (tm, tn) f32
    k = pl.program_id(2)

    @pl.when(k == 0)
    def _():
        acc_ref[...] = jnp.zeros_like(acc_ref)

    acc_ref[...] += jnp.dot(x_ref[...], w_ref[...],
                            preferred_element_type=jnp.float32)

    @pl.when(k == pl.num_programs(2) - 1)
    def _():
        y = acc_ref[...] + b_ref[...]
        if act == "gelu":
            y = _gelu(y)
        elif act == "tanh":
            y = jnp.tanh(y)
        o_ref[...] = y.astype(o_ref.dtype)


def linear(x, w_t, b, act="none", out_dtype=jnp.bfloat16, tm=256, tn=512, tk=512):
    """y = x @ w_t + b (+ optional activation). w_t is already (K, N)."""
    M, K = x.shape
    K2, N = w_t.shape
    assert K == K2, (K, K2)

    tm = min(tm, _round_up(M, 8))
    tn = min(tn, _round_up(N, 128))
    tk = min(tk, _round_up(K, 128))
    Mp, Np, Kp = _round_up(M, tm), _round_up(N, tn), _round_up(K, tk)

    xp = _pad2(x.astype(jnp.bfloat16), Mp, Kp)
    wp = _pad2(w_t.astype(jnp.bfloat16), Kp, Np)
    bp = _pad2(b.reshape(1, N).astype(jnp.float32), 1, Np)

    out = pl.pallas_call(
        functools.partial(_linear_kernel, act=act),
        out_shape=jax.ShapeDtypeStruct((Mp, Np), out_dtype),
        grid_spec=pltpu.PrefetchScalarGridSpec(
            num_scalar_prefetch=0,
            grid=(Mp // tm, Np // tn, Kp // tk),
            in_specs=[
                pl.BlockSpec((tm, tk), lambda i, j, k: (i, k)),
                pl.BlockSpec((tk, tn), lambda i, j, k: (k, j)),
                pl.BlockSpec((1, tn), lambda i, j, k: (0, j)),
            ],
            out_specs=pl.BlockSpec((tm, tn), lambda i, j, k: (i, j)),
            scratch_shapes=[pltpu.VMEM((tm, tn), jnp.float32)],
        ),
        compiler_params=pltpu.CompilerParams(
            dimension_semantics=("parallel", "parallel", "arbitrary"),
            vmem_limit_bytes=_VMEM_LIMIT),
    )(xp, wp, bp)
    return out[:M, :N]


def _ln_kernel(x_ref, g_ref, b_ref, o_ref, *, eps):
    x = x_ref[...].astype(jnp.float32)
    mean = jnp.mean(x, axis=-1, keepdims=True)
    var = jnp.mean(jnp.square(x - mean), axis=-1, keepdims=True)
    y = (x - mean) * jax.lax.rsqrt(var + eps)
    o_ref[...] = (y * g_ref[...] + b_ref[...]).astype(o_ref.dtype)


def _add_ln_kernel(x_ref, r_ref, g_ref, b_ref, o_ref, *, eps):
    x = x_ref[...].astype(jnp.float32) + r_ref[...].astype(jnp.float32)
    mean = jnp.mean(x, axis=-1, keepdims=True)
    var = jnp.mean(jnp.square(x - mean), axis=-1, keepdims=True)
    y = (x - mean) * jax.lax.rsqrt(var + eps)
    o_ref[...] = (y * g_ref[...] + b_ref[...]).astype(o_ref.dtype)


def layernorm(x, g, b, eps, residual=None, out_dtype=jnp.bfloat16, tm=512):
    """LayerNorm(x [+ residual]) tiled over rows."""
    M, H = x.shape
    tm = min(tm, _round_up(M, 8))
    Mp = _round_up(M, tm)

    xp = _pad2(x, Mp, H)
    g2 = g.reshape(1, H).astype(jnp.float32)
    b2 = b.reshape(1, H).astype(jnp.float32)

    row_spec = pl.BlockSpec((tm, H), lambda i: (i, 0))
    vec_spec = pl.BlockSpec((1, H), lambda i: (0, 0))

    if residual is None:
        kernel = functools.partial(_ln_kernel, eps=eps)
        inputs = (xp, g2, b2)
        in_specs = [row_spec, vec_spec, vec_spec]
    else:
        rp = _pad2(residual, Mp, H)
        kernel = functools.partial(_add_ln_kernel, eps=eps)
        inputs = (xp, rp, g2, b2)
        in_specs = [row_spec, row_spec, vec_spec, vec_spec]

    out = pl.pallas_call(
        kernel,
        out_shape=jax.ShapeDtypeStruct((Mp, H), out_dtype),
        grid=(Mp // tm,),
        in_specs=in_specs,
        out_specs=row_spec,
        compiler_params=pltpu.CompilerParams(
            dimension_semantics=("parallel",),
            vmem_limit_bytes=_VMEM_LIMIT),
    )(*inputs)
    return out[:M]


def _attention_kernel(q_ref, k_ref, v_ref, bias_ref, o_ref, *, scale, num_heads, head_dim):
    # q/k/v: (1, S, H) bf16 head-merged; bias: (1, 1, S) f32 additive mask.
    q = q_ref[0]            # (S, H)
    k = k_ref[0]
    v = v_ref[0]
    bias = bias_ref[0]      # (1, S)

    ctxs = []
    for h in range(num_heads):
        sl = slice(h * head_dim, (h + 1) * head_dim)
        qh, kh, vh = q[:, sl], k[:, sl], v[:, sl]
        s = jax.lax.dot_general(
            qh, kh, dimension_numbers=(((1,), (1,)), ((), ())),
            preferred_element_type=jnp.float32) * scale          # (S, S) f32
        s = s + bias
        s = s - jnp.max(s, axis=-1, keepdims=True)
        p = jnp.exp(s)
        p = p * pl.reciprocal(jnp.sum(p, axis=-1, keepdims=True), approx=True)
        ctxs.append(jnp.dot(p.astype(vh.dtype), vh,
                            preferred_element_type=jnp.float32))  # (S, Dh) f32
    # single lane-dense (S, H) store instead of per-head 64-wide masked stores
    o_ref[0] = jnp.concatenate(ctxs, axis=-1).astype(o_ref.dtype)


def attention(q, k, v, bias, scale, num_heads):
    # q, k, v: (B, S, H) bf16 (head-merged); bias: (B, 1, S) f32
    B, S, H = q.shape
    head_dim = H // num_heads
    qkv_spec = pl.BlockSpec((1, S, H), lambda b: (b, 0, 0))
    return pl.pallas_call(
        functools.partial(_attention_kernel, scale=scale,
                          num_heads=num_heads, head_dim=head_dim),
        out_shape=jax.ShapeDtypeStruct((B, S, H), jnp.bfloat16),
        grid=(B,),
        in_specs=[qkv_spec, qkv_spec, qkv_spec,
                  pl.BlockSpec((1, 1, S), lambda b: (b, 0, 0))],
        out_specs=qkv_spec,
        compiler_params=pltpu.CompilerParams(
            dimension_semantics=("parallel",),
            vmem_limit_bytes=_VMEM_LIMIT),
    )(q, k, v, bias)


# ----------------------------- parameters -----------------------------------

def init_params(key, cfg):
    H = cfg["hidden_size"]
    V = cfg["vocab_size"]
    I = cfg["intermediate_size"]
    std = cfg["initializer_range"]
    keys = iter(jax.random.split(key, 8 + 8 * cfg["num_hidden_layers"] + 16))

    def nrm(shape):
        return jax.random.normal(next(keys), shape, jnp.float32) * std

    params = {
        "word_emb": nrm((V, H)),
        "pos_emb": nrm((cfg["max_position_embeddings"], H)),
        "type_emb": nrm((cfg["type_vocab_size"], H)),
        "emb_ln_g": jnp.ones((H,), jnp.float32),
        "emb_ln_b": jnp.zeros((H,), jnp.float32),
        "layers": [],
        "pool_w": nrm((H, H)), "pool_b": jnp.zeros((H,), jnp.float32),
        "tr_w": nrm((H, H)), "tr_b": jnp.zeros((H,), jnp.float32),
        "tr_ln_g": jnp.ones((H,), jnp.float32), "tr_ln_b": jnp.zeros((H,), jnp.float32),
        "dec_bias": jnp.zeros((V,), jnp.float32),
        "nsp_w": nrm((2, H)), "nsp_b": jnp.zeros((2,), jnp.float32),
    }
    for _ in range(cfg["num_hidden_layers"]):
        params["layers"].append({
            "q_w": nrm((H, H)), "q_b": jnp.zeros((H,), jnp.float32),
            "k_w": nrm((H, H)), "k_b": jnp.zeros((H,), jnp.float32),
            "v_w": nrm((H, H)), "v_b": jnp.zeros((H,), jnp.float32),
            "o_w": nrm((H, H)), "o_b": jnp.zeros((H,), jnp.float32),
            "ln1_g": jnp.ones((H,), jnp.float32), "ln1_b": jnp.zeros((H,), jnp.float32),
            "i_w": nrm((I, H)), "i_b": jnp.zeros((I,), jnp.float32),
            "f_w": nrm((H, I)), "f_b": jnp.zeros((H,), jnp.float32),
            "ln2_g": jnp.ones((H,), jnp.float32), "ln2_b": jnp.zeros((H,), jnp.float32),
        })
    return params


def prepare_params(params):
    """One-time layout prep: transpose every nn.Linear weight to (in, out), fuse
    the per-layer Q/K/V projections into one (H, 3H) weight, cast matmul weights
    to bf16 (LayerNorm scales / biases / embedding tables stay f32)."""
    def wt(w):  # (out, in) -> (in, out), bf16 for the MXU
        return jnp.asarray(w, jnp.bfloat16).T

    prepped = {
        "word_emb": params["word_emb"],
        "pos_emb": params["pos_emb"],
        "type_emb": params["type_emb"],
        "emb_ln_g": params["emb_ln_g"], "emb_ln_b": params["emb_ln_b"],
        "pool_wt": wt(params["pool_w"]), "pool_b": params["pool_b"],
        "tr_wt": wt(params["tr_w"]), "tr_b": params["tr_b"],
        "tr_ln_g": params["tr_ln_g"], "tr_ln_b": params["tr_ln_b"],
        # MLM decoder weight tied to the word embedding table
        "dec_wt": jnp.asarray(params["word_emb"], jnp.bfloat16).T,   # (H, V)
        "dec_bias": params["dec_bias"],
        "nsp_wt": wt(params["nsp_w"]), "nsp_b": params["nsp_b"],
        "layers": [],
    }
    for layer in params["layers"]:
        qkv_w = jnp.concatenate([layer["q_w"], layer["k_w"], layer["v_w"]], axis=0)  # (3H, H)
        qkv_b = jnp.concatenate([layer["q_b"], layer["k_b"], layer["v_b"]], axis=0)  # (3H,)
        prepped["layers"].append({
            "qkv_wt": wt(qkv_w), "qkv_b": qkv_b,
            "o_wt": wt(layer["o_w"]), "o_b": layer["o_b"],
            "ln1_g": layer["ln1_g"], "ln1_b": layer["ln1_b"],
            "i_wt": wt(layer["i_w"]), "i_b": layer["i_b"],
            "f_wt": wt(layer["f_w"]), "f_b": layer["f_b"],
            "ln2_g": layer["ln2_g"], "ln2_b": layer["ln2_b"],
        })
    return prepped


# ----------------------------- model forward ---------------------------------

def bert_for_pretraining(prepped, input_ids, token_type_ids, cfg):
    B, S = input_ids.shape
    H = cfg["hidden_size"]
    NH = cfg["num_attention_heads"]
    Dh = H // NH
    V = cfg["vocab_size"]
    eps = cfg["layer_norm_eps"]
    scale = 1.0 / math.sqrt(Dh)

    # attention_mask = (input_ids > 0); precompute the additive bias once (hoisted
    # out of the per-head kernel): 0.0 keep / -10000.0 pad, shape (B, 1, S)
    attn_bias = ((input_ids > 0).astype(jnp.float32) - 1.0)[:, None, :] * 10000.0

    # ---- embeddings (gathers are plain-JAX glue; layernorm in Pallas) ----
    word = prepped["word_emb"][input_ids]                         # (B, S, H)
    pos = prepped["pos_emb"][jnp.arange(S)][None, :, :]           # (1, S, H)
    tok = prepped["type_emb"][token_type_ids]                     # (B, S, H)
    x = (word + pos + tok).reshape(B * S, H)
    x = layernorm(x, prepped["emb_ln_g"], prepped["emb_ln_b"], eps)   # bf16
    # dropout: eval mode -> identity

    # ---- encoder layers ----
    for layer in prepped["layers"]:
        # fused Q/K/V projection: one (B*S, H) @ (H, 3H) matmul
        qkv = linear(x, layer["qkv_wt"], layer["qkv_b"])              # (B*S, 3H) bf16
        q = qkv[:, 0 * H:1 * H].reshape(B, S, H)
        k = qkv[:, 1 * H:2 * H].reshape(B, S, H)
        v = qkv[:, 2 * H:3 * H].reshape(B, S, H)
        ctx = attention(q, k, v, attn_bias, scale, NH).reshape(B * S, H)
        attn_out = linear(ctx, layer["o_wt"], layer["o_b"])
        x = layernorm(attn_out, layer["ln1_g"], layer["ln1_b"], eps, residual=x)
        inter = linear(x, layer["i_wt"], layer["i_b"], act="gelu")
        ffn_out = linear(inter, layer["f_wt"], layer["f_b"])
        x = layernorm(ffn_out, layer["ln2_g"], layer["ln2_b"], eps, residual=x)

    sequence_output = x.reshape(B, S, H)

    # ---- pooler: first token -> dense -> tanh (config.last_fn = 'tanh') ----
    first_tok = sequence_output[:, 0, :]                              # (B, H)
    pooled = linear(first_tok, prepped["pool_wt"], prepped["pool_b"],
                    act="tanh", out_dtype=jnp.float32)

    # ---- BertPreTrainingHeads ----
    # MLM: transform (dense + gelu + layernorm), decoder tied to word embeddings + bias
    t = linear(x, prepped["tr_wt"], prepped["tr_b"], act="gelu")
    t = layernorm(t, prepped["tr_ln_g"], prepped["tr_ln_b"], eps)
    prediction_scores = linear(t, prepped["dec_wt"], prepped["dec_bias"],
                               out_dtype=jnp.float32)
    prediction_scores = prediction_scores.reshape(B, S, V)

    # NSP: Linear(hidden, 2) on pooled output
    seq_relationship_score = linear(pooled, prepped["nsp_wt"], prepped["nsp_b"],
                                    out_dtype=jnp.float32)           # (B, 2)

    # masked_lm_labels / next_sentence_label not provided -> return logits
    # TODO(synk): CrossEntropyLoss(ignore_index=-1) training path not implemented (label-less forward).
    return prediction_scores, seq_relationship_score


# ----------------------------------- main ------------------------------------

if __name__ == "__main__":
    cfg = dict(
        vocab_size=128,
        hidden_size=64,
        num_hidden_layers=2,
        num_attention_heads=4,
        intermediate_size=128,
        max_position_embeddings=32,
        type_vocab_size=2,
        layer_norm_eps=1e-12,
        initializer_range=0.02,
    )
    B, S = 2, 8

    root = jax.random.PRNGKey(0)
    k_params, k_ids, k_seg = jax.random.split(root, 3)
    params = init_params(k_params, cfg)
    prepped = prepare_params(params)   # one-time weight transpose / QKV fuse / bf16 cast

    input_ids = jax.random.randint(k_ids, (B, S), 1, cfg["vocab_size"], dtype=jnp.int32)
    input_ids = input_ids.at[:, -1].set(0)  # a padding position to exercise the mask
    token_type_ids = jnp.concatenate(
        [jnp.zeros((B, S // 2), jnp.int32), jnp.ones((B, S // 2), jnp.int32)], axis=1)

    fwd = jax.jit(functools.partial(bert_for_pretraining, cfg=cfg))
    prediction_scores, seq_relationship_score = fwd(prepped, input_ids, token_type_ids)
    jax.block_until_ready((prediction_scores, seq_relationship_score))

    assert prediction_scores.shape == (B, S, cfg["vocab_size"])
    assert seq_relationship_score.shape == (B, 2)
    assert bool(jnp.all(jnp.isfinite(prediction_scores)))
    assert bool(jnp.all(jnp.isfinite(seq_relationship_score)))
    print("KERNEL_OK")
</pallas_src>

<mosaic_0001>
module attributes {stable_mosaic.version = 11 : i64} {
  func.func @_ln_kernel(%arg0: i32, %arg1: memref<16x64xf32, #tpu.memory_space<vmem>>, %arg2: memref<1x64xf32, #tpu.memory_space<vmem>>, %arg3: memref<1x64xf32, #tpu.memory_space<vmem>>, %arg4: memref<16x64xbf16, #tpu.memory_space<vmem>>) attributes {dimension_semantics = [#tpu.dimension_semantics<parallel>], iteration_bounds = array<i64: 1>, scalar_prefetch = 0 : i64, scratch_operands = 0 : i64, tpu.core_type = #tpu.core_type<tc>, window_params = [{transform_indices = @transform_0, window_bounds = array<i64: 16, 64>}, {pipeline_mode = #tpu.pipeline_mode<synchronous>, transform_indices = @transform_1, window_bounds = array<i64: 1, 64>}, {pipeline_mode = #tpu.pipeline_mode<synchronous>, transform_indices = @transform_2, window_bounds = array<i64: 1, 64>}, {transform_indices = @transform_3, window_bounds = array<i64: 16, 64>}]} {
    %c0 = arith.constant 0 : index
    %c0_0 = arith.constant 0 : index
    %0 = vector.load %arg1[%c0, %c0_0] : memref<16x64xf32, #tpu.memory_space<vmem>>, vector<16x64xf32>
    %cst = arith.constant dense<0.000000e+00> : vector<16xf32>
    %1 = vector.multi_reduction <add>, %0, %cst [1] : vector<16x64xf32> to vector<16xf32>
    %2 = vector.shape_cast %1 : vector<16xf32> to vector<16x1xf32>
    %cst_1 = arith.constant 6.400000e+01 : f32
    %3 = vector.broadcast %cst_1 : f32 to vector<16x1xf32>
    %4 = arith.divf %2, %3 : vector<16x1xf32>
    %5 = vector.broadcast %4 : vector<16x1xf32> to vector<16x64xf32>
    %6 = arith.subf %0, %5 : vector<16x64xf32>
    %7 = arith.mulf %6, %6 : vector<16x64xf32>
    %cst_2 = arith.constant dense<0.000000e+00> : vector<16xf32>
    %8 = vector.multi_reduction <add>, %7, %cst_2 [1] : vector<16x64xf32> to vector<16xf32>
    %9 = vector.shape_cast %8 : vector<16xf32> to vector<16x1xf32>
    %cst_3 = arith.constant 6.400000e+01 : f32
    %10 = vector.broadcast %cst_3 : f32 to vector<16x1xf32>
    %11 = arith.divf %9, %10 : vector<16x1xf32>
    %12 = vector.broadcast %4 : vector<16x1xf32> to vector<16x64xf32>
    %13 = arith.subf %0, %12 : vector<16x64xf32>
    %cst_4 = arith.constant 9.99999996E-13 : f32
    %14 = vector.broadcast %cst_4 : f32 to vector<16x1xf32>
    %15 = arith.addf %11, %14 : vector<16x1xf32>
    %16 = math.rsqrt %15 : vector<16x1xf32>
    %17 = vector.broadcast %16 : vector<16x1xf32> to vector<16x64xf32>
    %18 = arith.mulf %13, %17 : vector<16x64xf32>
    %c0_5 = arith.constant 0 : index
    %c0_6 = arith.constant 0 : index
    %19 = vector.load %arg2[%c0_5, %c0_6] : memref<1x64xf32, #tpu.memory_space<vmem>>, vector<1x64xf32>
    %20 = vector.broadcast %19 : vector<1x64xf32> to vector<16x64xf32>
    %21 = arith.mulf %18, %20 : vector<16x64xf32>
    %c0_7 = arith.constant 0 : index
    %c0_8 = arith.constant 0 : index
    %22 = vector.load %arg3[%c0_7, %c0_8] : memref<1x64xf32, #tpu.memory_space<vmem>>, vector<1x64xf32>
    %23 = vector.broadcast %22 : vector<1x64xf32> to vector<16x64xf32>
    %24 = arith.addf %21, %23 : vector<16x64xf32>
    %25 = arith.truncf %24 : vector<16x64xf32> to vector<16x64xbf16>
    %c0_9 = arith.constant 0 : index
    %c0_10 = arith.constant 0 : index
    %26 = vector.load %arg4[%c0_9, %c0_10] : memref<16x64xbf16, #tpu.memory_space<vmem>>, vector<16x64xbf16>
    tpu.vector_store %arg4[%c0_9, %c0_10], %25 {strides = array<i32>} : memref<16x64xbf16, #tpu.memory_space<vmem>>, vector<16x64xbf16>,
    return
  }
  func.func @transform_0(%arg0: i32) -> (i32, i32) {
    %c0_i32 = arith.constant 0 : i32
    %c0_i32_0 = arith.constant 0 : i32
    return %arg0, %c0_i32 : i32, i32
  }
  func.func @transform_1(%arg0: i32) -> (i32, i32) {
    %c0_i32 = arith.constant 0 : i32
    %c0_i32_0 = arith.constant 0 : i32
    %c0_i32_1 = arith.constant 0 : i32
    return %c0_i32, %c0_i32_0 : i32, i32
  }
  func.func @transform_2(%arg0: i32) -> (i32, i32) {
    %c0_i32 = arith.constant 0 : i32
    %c0_i32_0 = arith.constant 0 : i32
    %c0_i32_1 = arith.constant 0 : i32
    return %c0_i32, %c0_i32_0 : i32, i32
  }
  func.func @transform_3(%arg0: i32) -> (i32, i32) {
    %c0_i32 = arith.constant 0 : i32
    %c0_i32_0 = arith.constant 0 : i32
    return %arg0, %c0_i32 : i32, i32
  }
}

module attributes {stable_mosaic.version = 11 : i64} {
  func.func @_linear_kernel(%arg0: i32, %arg1: i32, %arg2: i32, %arg3: memref<16x128xbf16, #tpu.memory_space<vmem>>, %arg4: memref<128x256xbf16, #tpu.memory_space<vmem>>, %arg5: memref<1x256xf32, #tpu.memory_space<vmem>>, %arg6: memref<16x256xbf16, #tpu.memory_space<vmem>>, %arg7: memref<16x256xf32, #tpu.memory_space<vmem>>) attributes {dimension_semantics = [#tpu.dimension_semantics<parallel>, #tpu.dimension_semantics<parallel>, #tpu.dimension_semantics<arbitrary>], iteration_bounds = array<i64: 1, 1, 1>, scalar_prefetch = 0 : i64, scratch_operands = 1 : i64, tpu.core_type = #tpu.core_type<tc>, window_params = [{transform_indices = @transform_0, window_bounds = array<i64: 16, 128>}, {transform_indices = @transform_1, window_bounds = array<i64: 128, 256>}, {transform_indices = @transform_2, window_bounds = array<i64: 1, 256>}, {transform_indices = @transform_3, window_bounds = array<i64: 16, 256>}]} {
    %c0_i32 = arith.constant 0 : i32
    %0 = arith.cmpi eq, %arg2, %c0_i32 : i32
    %1 = arith.extui %0 : i1 to i32
    %c0_i32_0 = arith.constant 0 : i32
    %2 = arith.cmpi ne, %1, %c0_i32_0 : i32
    scf.if %2 {
      %cst_10 = arith.constant 0.000000e+00 : f32
      %12 = vector.broadcast %cst_10 : f32 to vector<16x256xf32>
      %c0_11 = arith.constant 0 : index
      %c0_12 = arith.constant 0 : index
      %13 = vector.load %arg7[%c0_11, %c0_12] : memref<16x256xf32, #tpu.memory_space<vmem>>, vector<16x256xf32>
      tpu.vector_store %arg7[%c0_11, %c0_12], %12 {strides = array<i32>} : memref<16x256xf32, #tpu.memory_space<vmem>>, vector<16x256xf32>,
    } else {
    }
    %c0 = arith.constant 0 : index
    %c0_1 = arith.constant 0 : index
    %3 = vector.load %arg7[%c0, %c0_1] : memref<16x256xf32, #tpu.memory_space<vmem>>, vector<16x256xf32>
    %c0_2 = arith.constant 0 : index
    %c0_3 = arith.constant 0 : index
    %4 = vector.load %arg3[%c0_2, %c0_3] : memref<16x128xbf16, #tpu.memory_space<vmem>>, vector<16x128xbf16>
    %c0_4 = arith.constant 0 : index
    %c0_5 = arith.constant 0 : index
    %5 = vector.load %arg4[%c0_4, %c0_5] : memref<128x256xbf16, #tpu.memory_space<vmem>>, vector<128x256xbf16>
    %cst = arith.constant dense<0.000000e+00> : vector<16x256xf32>
    %6 = tpu.matmul %4, %5, %cst {dimension_numbers = #tpu.dot_dimension_numbers<[1], [0], [0], [1], [0, 0, 1, 1], [], []>} : vector<16x128xbf16>, vector<128x256xbf16>, vector<16x256xf32> -> vector<16x256xf32>
    %7 = arith.addf %3, %6 : vector<16x256xf32>
    %c0_6 = arith.constant 0 : index
    %c0_7 = arith.constant 0 : index
    %8 = vector.load %arg7[%c0_6, %c0_7] : memref<16x256xf32, #tpu.memory_space<vmem>>, vector<16x256xf32>
    tpu.vector_store %arg7[%c0_6, %c0_7], %7 {strides = array<i32>} : memref<16x256xf32, #tpu.memory_space<vmem>>, vector<16x256xf32>,
    %c0_i32_8 = arith.constant 0 : i32
    %9 = arith.cmpi eq, %arg2, %c0_i32_8 : i32
    %10 = arith.extui %9 : i1 to i32
    %c0_i32_9 = arith.constant 0 : i32
    %11 = arith.cmpi ne, %10, %c0_i32_9 : i32
    scf.if %11 {
      %c0_10 = arith.constant 0 : index
      %c0_11 = arith.constant 0 : index
      %12 = vector.load %arg7[%c0_10, %c0_11] : memref<16x256xf32, #tpu.memory_space<vmem>>, vector<16x256xf32>
      %c0_12 = arith.constant 0 : index
      %c0_13 = arith.constant 0 : index
      %13 = vector.load %arg5[%c0_12, %c0_13] : memref<1x256xf32, #tpu.memory_space<vmem>>, vector<1x256xf32>
      %14 = vector.broadcast %13 : vector<1x256xf32> to vector<16x256xf32>
      %15 = arith.addf %12, %14 : vector<16x256xf32>
      %16 = arith.truncf %15 : vector<16x256xf32> to vector<16x256xbf16>
      %c0_14 = arith.constant 0 : index
      %c0_15 = arith.constant 0 : index
      %17 = vector.load %arg6[%c0_14, %c0_15] : memref<16x256xbf16, #tpu.memory_space<vmem>>, vector<16x256xbf16>
      tpu.vector_store %arg6[%c0_14, %c0_15], %16 {strides = array<i32>} : memref<16x256xbf16, #tpu.memory_space<vmem>>, vector<16x256xbf16>,
    } else {
    }
    return
  }
  func.func @transform_0(%arg0: i32, %arg1: i32, %arg2: i32) -> (i32, i32) {
    %c0_i32 = arith.constant 0 : i32
    return %arg0, %arg2 : i32, i32
  }
  func.func @transform_1(%arg0: i32, %arg1: i32, %arg2: i32) -> (i32, i32) {
    %c0_i32 = arith.constant 0 : i32
    return %arg2, %arg1 : i32, i32
  }
  func.func @transform_2(%arg0: i32, %arg1: i32, %arg2: i32) -> (i32, i32) {
    %c0_i32 = arith.constant 0 : i32
    %c0_i32_0 = arith.constant 0 : i32
    return %c0_i32, %arg1 : i32, i32
  }
  func.func @transform_3(%arg0: i32, %arg1: i32, %arg2: i32) -> (i32, i32) {
    %c0_i32 = arith.constant 0 : i32
    return %arg0, %arg1 : i32, i32
  }
}

module attributes {stable_mosaic.version = 11 : i64} {
  func.func @_attention_kernel(%arg0: i32, %arg1: memref<1x8x64xbf16, #tpu.memory_space<vmem>>, %arg2: memref<1x8x64xbf16, #tpu.memory_space<vmem>>, %arg3: memref<1x8x64xbf16, #tpu.memory_space<vmem>>, %arg4: memref<1x1x8xf32, #tpu.memory_space<vmem>>, %arg5: memref<1x8x64xbf16, #tpu.memory_space<vmem>>) attributes {dimension_semantics = [#tpu.dimension_semantics<parallel>], iteration_bounds = array<i64: 2>, scalar_prefetch = 0 : i64, scratch_operands = 0 : i64, tpu.core_type = #tpu.core_type<tc>, window_params = [{transform_indices = @transform_0, window_bounds = array<i64: 1, 8, 64>}, {transform_indices = @transform_1, window_bounds = array<i64: 1, 8, 64>}, {transform_indices = @transform_2, window_bounds = array<i64: 1, 8, 64>}, {transform_indices = @transform_3, window_bounds = array<i64: 1, 1, 8>}, {transform_indices = @transform_4, window_bounds = array<i64: 1, 8, 64>}]} {
    %c0 = arith.constant 0 : index
    %c0_0 = arith.constant 0 : index
    %c0_1 = arith.constant 0 : index
    %0 = vector.load %arg1[%c0, %c0_0, %c0_1] : memref<1x8x64xbf16, #tpu.memory_space<vmem>>, vector<1x8x64xbf16>
    %1 = vector.shape_cast %0 : vector<1x8x64xbf16> to vector<8x64xbf16>
    %c0_2 = arith.constant 0 : index
    %c0_3 = arith.constant 0 : index
    %c0_4 = arith.constant 0 : index
    %2 = vector.load %arg2[%c0_2, %c0_3, %c0_4] : memref<1x8x64xbf16, #tpu.memory_space<vmem>>, vector<1x8x64xbf16>
    %3 = vector.shape_cast %2 : vector<1x8x64xbf16> to vector<8x64xbf16>
    %c0_5 = arith.constant 0 : index
    %c0_6 = arith.constant 0 : index
    %c0_7 = arith.constant 0 : index
    %4 = vector.load %arg3[%c0_5, %c0_6, %c0_7] : memref<1x8x64xbf16, #tpu.memory_space<vmem>>, vector<1x8x64xbf16>
    %5 = vector.shape_cast %4 : vector<1x8x64xbf16> to vector<8x64xbf16>
    %c0_8 = arith.constant 0 : index
    %c0_9 = arith.constant 0 : index
    %c0_10 = arith.constant 0 : index
    %6 = vector.load %arg4[%c0_8, %c0_9, %c0_10] : memref<1x1x8xf32, #tpu.memory_space<vmem>>, vector<1x1x8xf32>
    %7 = vector.shape_cast %6 : vector<1x1x8xf32> to vector<1x8xf32>
    %8 = vector.extract_strided_slice %1 {offsets = [0, 0], sizes = [8, 16], strides = [1, 1]} : vector<8x64xbf16> to vector<8x16xbf16>
    %9 = vector.extract_strided_slice %3 {offsets = [0, 0], sizes = [8, 16], strides = [1, 1]} : vector<8x64xbf16> to vector<8x16xbf16>
    %10 = vector.extract_strided_slice %5 {offsets = [0, 0], sizes = [8, 16], strides = [1, 1]} : vector<8x64xbf16> to vector<8x16xbf16>
    %cst = arith.constant dense<0.000000e+00> : vector<8x8xf32>
    %11 = tpu.matmul %8, %9, %cst {dimension_numbers = #tpu.dot_dimension_numbers<[1], [1], [0], [0], [0, 0, 1, 0], [], []>} : vector<8x16xbf16>, vector<8x16xbf16>, vector<8x8xf32> -> vector<8x8xf32>
    %cst_11 = arith.constant 2.500000e-01 : f32
    %12 = vector.broadcast %cst_11 : f32 to vector<8x8xf32>
    %13 = arith.mulf %11, %12 : vector<8x8xf32>
    %14 = vector.broadcast %7 : vector<1x8xf32> to vector<8x8xf32>
    %15 = arith.addf %13, %14 : vector<8x8xf32>
    %cst_12 = arith.constant dense<0xFF800000> : vector<8xf32>
    %16 = vector.multi_reduction <maximumf>, %15, %cst_12 [1] : vector<8x8xf32> to vector<8xf32>
    %17 = vector.shape_cast %16 : vector<8xf32> to vector<8x1xf32>
    %18 = vector.broadcast %17 : vector<8x1xf32> to vector<8x8xf32>
    %19 = arith.subf %15, %18 : vector<8x8xf32>
    %20 = math.exp %19 : vector<8x8xf32>
    %cst_13 = arith.constant dense<0.000000e+00> : vector<8xf32>
    %21 = vector.multi_reduction <add>, %20, %cst_13 [1] : vector<8x8xf32> to vector<8xf32>
    %22 = vector.shape_cast %21 : vector<8xf32> to vector<8x1xf32>
    %23 = tpu.reciprocal %22 {approx = true} : vector<8x1xf32> -> vector<8x1xf32>
    %24 = vector.broadcast %23 : vector<8x1xf32> to vector<8x8xf32>
    %25 = arith.mulf %20, %24 : vector<8x8xf32>
    %26 = arith.truncf %25 : vector<8x8xf32> to vector<8x8xbf16>
    %cst_14 = arith.constant dense<0.000000e+00> : vector<8x16xf32>
    %27 = tpu.matmul %26, %10, %cst_14 {dimension_numbers = #tpu.dot_dimension_numbers<[1], [0], [0], [1], [0, 0, 1, 1], [], []>} : vector<8x8xbf16>, vector<8x16xbf16>, vector<8x16xf32> -> vector<8x16xf32>
    %28 = vector.extract_strided_slice %1 {offsets = [0, 16], sizes = [8, 16], strides = [1, 1]} : vector<8x64xbf16> to vector<8x16xbf16>
    %29 = vector.extract_strided_slice %3 {offsets = [0, 16], sizes = [8, 16], strides = [1, 1]} : vector<8x64xbf16> to vector<8x16xbf16>
    %30 = vector.extract_strided_slice %5 {offsets = [0, 16], sizes = [8, 16], strides = [1, 1]} : vector<8x64xbf16> to vector<8x16xbf16>
    %cst_15 = arith.constant dense<0.000000e+00> : vector<8x8xf32>
    %31 = tpu.matmul %28, %29, %cst_15 {dimension_numbers = #tpu.dot_dimension_numbers<[1], [1], [0], [0], [0, 0, 1, 0], [], []>} : vector<8x16xbf16>, vector<8x16xbf16>, vector<8x8xf32> -> vector<8x8xf32>
    %cst_16 = arith.constant 2.500000e-01 : f32
    %32 = vector.broadcast %cst_16 : f32 to vector<8x8xf32>
    %33 = arith.mulf %31, %32 : vector<8x8xf32>
    %34 = vector.broadcast %7 : vector<1x8xf32> to vector<8x8xf32>
    %35 = arith.addf %33, %34 : vector<8x8xf32>
    %cst_17 = arith.constant dense<0xFF800000> : vector<8xf32>
    %36 = vector.multi_reduction <maximumf>, %35, %cst_17 [1] : vector<8x8xf32> to vector<8xf32>
    %37 = vector.shape_cast %36 : vector<8xf32> to vector<8x1xf32>
    %38 = vector.broadcast %37 : vector<8x1xf32> to vector<8x8xf32>
    %39 = arith.subf %35, %38 : vector<8x8xf32>
    %40 = math.exp %39 : vector<8x8xf32>
    %cst_18 = arith.constant dense<0.000000e+00> : vector<8xf32>
    %41 = vector.multi_reduction <add>, %40, %cst_18 [1] : vector<8x8xf32> to vector<8xf32>
    %42 = vector.shape_cast %41 : vector<8xf32> to vector<8x1xf32>
    %43 = tpu.reciprocal %42 {approx = true} : vector<8x1xf32> -> vector<8x1xf32>
    %44 = vector.broadcast %43 : vector<8x1xf32> to vector<8x8xf32>
    %45 = arith.mulf %40, %44 : vector<8x8xf32>
    %46 = arith.truncf %45 : vector<8x8xf32> to vector<8x8xbf16>
    %cst_19 = arith.constant dense<0.000000e+00> : vector<8x16xf32>
    %47 = tpu.matmul %46, %30, %cst_19 {dimension_numbers = #tpu.dot_dimension_numbers<[1], [0], [0], [1], [0, 0, 1, 1], [], []>} : vector<8x8xbf16>, vector<8x16xbf16>, vector<8x16xf32> -> vector<8x16xf32>
    %48 = vector.extract_strided_slice %1 {offsets = [0, 32], sizes = [8, 16], strides = [1, 1]} : vector<8x64xbf16> to vector<8x16xbf16>
    %49 = vector.extract_strided_slice %3 {offsets = [0, 32], sizes = [8, 16], strides = [1, 1]} : vector<8x64xbf16> to vector<8x16xbf16>
    %50 = vector.extract_strided_slice %5 {offsets = [0, 32], sizes = [8, 16], strides = [1, 1]} : vector<8x64xbf16> to vector<8x16xbf16>
    %cst_20 = arith.constant dense<0.000000e+00> : vector<8x8xf32>
    %51 = tpu.matmul %48, %49, %cst_20 {dimension_numbers = #tpu.dot_dimension_numbers<[1], [1], [0], [0], [0, 0, 1, 0], [], []>} : vector<8x16xbf16>, vector<8x16xbf16>, vector<8x8xf32> -> vector<8x8xf32>
    %cst_21 = arith.constant 2.500000e-01 : f32
    %52 = vector.broadcast %cst_21 : f32 to vector<8x8xf32>
    %53 = arith.mulf %51, %52 : vector<8x8xf32>
    %54 = vector.broadcast %7 : vector<1x8xf32> to vector<8x8xf32>
    %55 = arith.addf %53, %54 : vector<8x8xf32>
    %cst_22 = arith.constant dense<0xFF800000> : vector<8xf32>
    %56 = vector.multi_reduction <maximumf>, %55, %cst_22 [1] : vector<8x8xf32> to vector<8xf32>
    %57 = vector.shape_cast %56 : vector<8xf32> to vector<8x1xf32>
    %58 = vector.broadcast %57 : vector<8x1xf32> to vector<8x8xf32>
    %59 = arith.subf %55, %58 : vector<8x8xf32>
    %60 = math.exp %59 : vector<8x8xf32>
    %cst_23 = arith.constant dense<0.000000e+00> : vector<8xf32>
    %61 = vector.multi_reduction <add>, %60, %cst_23 [1] : vector<8x8xf32> to vector<8xf32>
    %62 = vector.shape_cast %61 : vector<8xf32> to vector<8x1xf32>
    %63 = tpu.reciprocal %62 {approx = true} : vector<8x1xf32> -> vector<8x1xf32>
    %64 = vector.broadcast %63 : vector<8x1xf32> to vector<8x8xf32>
    %65 = arith.mulf %60, %64 : vector<8x8xf32>
    %66 = arith.truncf %65 : vector<8x8xf32> to vector<8x8xbf16>
    %cst_24 = arith.constant dense<0.000000e+00> : vector<8x16xf32>
    %67 = tpu.matmul %66, %50, %cst_24 {dimension_numbers = #tpu.dot_dimension_numbers<[1], [0], [0], [1], [0, 0, 1, 1], [], []>} : vector<8x8xbf16>, vector<8x16xbf16>, vector<8x16xf32> -> vector<8x16xf32>
    %68 = vector.extract_strided_slice %1 {offsets = [0, 48], sizes = [8, 16], strides = [1, 1]} : vector<8x64xbf16> to vector<8x16xbf16>
    %69 = vector.extract_strided_slice %3 {offsets = [0, 48], sizes = [8, 16], strides = [1, 1]} : vector<8x64xbf16> to vector<8x16xbf16>
    %70 = vector.extract_strided_slice %5 {offsets = [0, 48], sizes = [8, 16], strides = [1, 1]} : vector<8x64xbf16> to vector<8x16xbf16>
    %cst_25 = arith.constant dense<0.000000e+00> : vector<8x8xf32>
    %71 = tpu.matmul %68, %69, %cst_25 {dimension_numbers = #tpu.dot_dimension_numbers<[1], [1], [0], [0], [0, 0, 1, 0], [], []>} : vector<8x16xbf16>, vector<8x16xbf16>, vector<8x8xf32> -> vector<8x8xf32>
    %cst_26 = arith.constant 2.500000e-01 : f32
    %72 = vector.broadcast %cst_26 : f32 to vector<8x8xf32>
    %73 = arith.mulf %71, %72 : vector<8x8xf32>
    %74 = vector.broadcast %7 : vector<1x8xf32> to vector<8x8xf32>
    %75 = arith.addf %73, %74 : vector<8x8xf32>
    %cst_27 = arith.constant dense<0xFF800000> : vector<8xf32>
    %76 = vector.multi_reduction <maximumf>, %75, %cst_27 [1] : vector<8x8xf32> to vector<8xf32>
    %77 = vector.shape_cast %76 : vector<8xf32> to vector<8x1xf32>
    %78 = vector.broadcast %77 : vector<8x1xf32> to vector<8x8xf32>
    %79 = arith.subf %75, %78 : vector<8x8xf32>
    %80 = math.exp %79 : vector<8x8xf32>
    %cst_28 = arith.constant dense<0.000000e+00> : vector<8xf32>
    %81 = vector.multi_reduction <add>, %80, %cst_28 [1] : vector<8x8xf32> to vector<8xf32>
    %82 = vector.shape_cast %81 : vector<8xf32> to vector<8x1xf32>
    %83 = tpu.reciprocal %82 {approx = true} : vector<8x1xf32> -> vector<8x1xf32>
    %84 = vector.broadcast %83 : vector<8x1xf32> to vector<8x8xf32>
    %85 = arith.mulf %80, %84 : vector<8x8xf32>
    %86 = arith.truncf %85 : vector<8x8xf32> to vector<8x8xbf16>
    %cst_29 = arith.constant dense<0.000000e+00> : vector<8x16xf32>
    %87 = tpu.matmul %86, %70, %cst_29 {dimension_numbers = #tpu.dot_dimension_numbers<[1], [0], [0], [1], [0, 0, 1, 1], [], []>} : vector<8x8xbf16>, vector<8x16xbf16>, vector<8x16xf32> -> vector<8x16xf32>
    %88 = tpu.concatenate %27, %47, %67, %87 in 1 : vector<8x16xf32>, vector<8x16xf32>, vector<8x16xf32>, vector<8x16xf32> -> vector<8x64xf32>
    %89 = arith.truncf %88 : vector<8x64xf32> to vector<8x64xbf16>
    %c0_30 = arith.constant 0 : index
    %c0_31 = arith.constant 0 : index
    %c0_32 = arith.constant 0 : index
    %90 = vector.load %arg5[%c0_30, %c0_31, %c0_32] : memref<1x8x64xbf16, #tpu.memory_space<vmem>>, vector<1x8x64xbf16>
    %91 = vector.shape_cast %90 : vector<1x8x64xbf16> to vector<8x64xbf16>
    %92 = vector.shape_cast %89 : vector<8x64xbf16> to vector<1x8x64xbf16>
    tpu.vector_store %arg5[%c0_30, %c0_31, %c0_32], %92 {strides = array<i32>} : memref<1x8x64xbf16, #tpu.memory_space<vmem>>, vector<1x8x64xbf16>,
    return
  }
  func.func @transform_0(%arg0: i32) -> (i32, i32, i32) {
    %c0_i32 = arith.constant 0 : i32
    %c0_i32_0 = arith.constant 0 : i32
    %c0_i32_1 = arith.constant 0 : i32
    return %arg0, %c0_i32, %c0_i32_0 : i32, i32, i32
  }
  func.func @transform_1(%arg0: i32) -> (i32, i32, i32) {
    %c0_i32 = arith.constant 0 : i32
    %c0_i32_0 = arith.constant 0 : i32
    %c0_i32_1 = arith.constant 0 : i32
    return %arg0, %c0_i32, %c0_i32_0 : i32, i32, i32
  }
  func.func @transform_2(%arg0: i32) -> (i32, i32, i32) {
    %c0_i32 = arith.constant 0 : i32
    %c0_i32_0 = arith.constant 0 : i32
    %c0_i32_1 = arith.constant 0 : i32
    return %arg0, %c0_i32, %c0_i32_0 : i32, i32, i32
  }
  func.func @transform_3(%arg0: i32) -> (i32, i32, i32) {
    %c0_i32 = arith.constant 0 : i32
    %c0_i32_0 = arith.constant 0 : i32
    %c0_i32_1 = arith.constant 0 : i32
    return %arg0, %c0_i32, %c0_i32_0 : i32, i32, i32
  }
  func.func @transform_4(%arg0: i32) -> (i32, i32, i32) {
    %c0_i32 = arith.constant 0 : i32
    %c0_i32_0 = arith.constant 0 : i32
    %c0_i32_1 = arith.constant 0 : i32
    return %arg0, %c0_i32, %c0_i32_0 : i32, i32, i32
  }
}

module attributes {stable_mosaic.version = 11 : i64} {
  func.func @_linear_kernel(%arg0: i32, %arg1: i32, %arg2: i32, %arg3: memref<16x128xbf16, #tpu.memory_space<vmem>>, %arg4: memref<128x128xbf16, #tpu.memory_space<vmem>>, %arg5: memref<1x128xf32, #tpu.memory_space<vmem>>, %arg6: memref<16x128xbf16, #tpu.memory_space<vmem>>, %arg7: memref<16x128xf32, #tpu.memory_space<vmem>>) attributes {dimension_semantics = [#tpu.dimension_semantics<parallel>, #tpu.dimension_semantics<parallel>, #tpu.dimension_semantics<arbitrary>], iteration_bounds = array<i64: 1, 1, 1>, scalar_prefetch = 0 : i64, scratch_operands = 1 : i64, tpu.core_type = #tpu.core_type<tc>, window_params = [{transform_indices = @transform_0, window_bounds = array<i64: 16, 128>}, {transform_indices = @transform_1, window_bounds = array<i64: 128, 128>}, {transform_indices = @transform_2, window_bounds = array<i64: 1, 128>}, {transform_indices = @transform_3, window_bounds = array<i64: 16, 128>}]} {
    %c0_i32 = arith.constant 0 : i32
    %0 = arith.cmpi eq, %arg2, %c0_i32 : i32
    %1 = arith.extui %0 : i1 to i32
    %c0_i32_0 = arith.constant 0 : i32
    %2 = arith.cmpi ne, %1, %c0_i32_0 : i32
    scf.if %2 {
      %cst_10 = arith.constant 0.000000e+00 : f32
      %12 = vector.broadcast %cst_10 : f32 to vector<16x128xf32>
      %c0_11 = arith.constant 0 : index
      %c0_12 = arith.constant 0 : index
      %13 = vector.load %arg7[%c0_11, %c0_12] : memref<16x128xf32, #tpu.memory_space<vmem>>, vector<16x128xf32>
      tpu.vector_store %arg7[%c0_11, %c0_12], %12 {strides = array<i32>} : memref<16x128xf32, #tpu.memory_space<vmem>>, vector<16x128xf32>,
    } else {
    }
    %c0 = arith.constant 0 : index
    %c0_1 = arith.constant 0 : index
    %3 = vector.load %arg7[%c0, %c0_1] : memref<16x128xf32, #tpu.memory_space<vmem>>, vector<16x128xf32>
    %c0_2 = arith.constant 0 : index
    %c0_3 = arith.constant 0 : index
    %4 = vector.load %arg3[%c0_2, %c0_3] : memref<16x128xbf16, #tpu.memory_space<vmem>>, vector<16x128xbf16>
    %c0_4 = arith.constant 0 : index
    %c0_5 = arith.constant 0 : index
    %5 = vector.load %arg4[%c0_4, %c0_5] : memref<128x128xbf16, #tpu.memory_space<vmem>>, vector<128x128xbf16>
    %cst = arith.constant dense<0.000000e+00> : vector<16x128xf32>
    %6 = tpu.matmul %4, %5, %cst {dimension_numbers = #tpu.dot_dimension_numbers<[1], [0], [0], [1], [0, 0, 1, 1], [], []>} : vector<16x128xbf16>, vector<128x128xbf16>, vector<16x128xf32> -> vector<16x128xf32>
    %7 = arith.addf %3, %6 : vector<16x128xf32>
    %c0_6 = arith.constant 0 : index
    %c0_7 = arith.constant 0 : index
    %8 = vector.load %arg7[%c0_6, %c0_7] : memref<16x128xf32, #tpu.memory_space<vmem>>, vector<16x128xf32>
    tpu.vector_store %arg7[%c0_6, %c0_7], %7 {strides = array<i32>} : memref<16x128xf32, #tpu.memory_space<vmem>>, vector<16x128xf32>,
    %c0_i32_8 = arith.constant 0 : i32
    %9 = arith.cmpi eq, %arg2, %c0_i32_8 : i32
    %10 = arith.extui %9 : i1 to i32
    %c0_i32_9 = arith.constant 0 : i32
    %11 = arith.cmpi ne, %10, %c0_i32_9 : i32
    scf.if %11 {
      %c0_10 = arith.constant 0 : index
      %c0_11 = arith.constant 0 : index
      %12 = vector.load %arg7[%c0_10, %c0_11] : memref<16x128xf32, #tpu.memory_space<vmem>>, vector<16x128xf32>
      %c0_12 = arith.constant 0 : index
      %c0_13 = arith.constant 0 : index
      %13 = vector.load %arg5[%c0_12, %c0_13] : memref<1x128xf32, #tpu.memory_space<vmem>>, vector<1x128xf32>
      %14 = vector.broadcast %13 : vector<1x128xf32> to vector<16x128xf32>
      %15 = arith.addf %12, %14 : vector<16x128xf32>
      %16 = arith.truncf %15 : vector<16x128xf32> to vector<16x128xbf16>
      %c0_14 = arith.constant 0 : index
      %c0_15 = arith.constant 0 : index
      %17 = vector.load %arg6[%c0_14, %c0_15] : memref<16x128xbf16, #tpu.memory_space<vmem>>, vector<16x128xbf16>
      tpu.vector_store %arg6[%c0_14, %c0_15], %16 {strides = array<i32>} : memref<16x128xbf16, #tpu.memory_space<vmem>>, vector<16x128xbf16>,
    } else {
    }
    return
  }
  func.func @transform_0(%arg0: i32, %arg1: i32, %arg2: i32) -> (i32, i32) {
    %c0_i32 = arith.constant 0 : i32
    return %arg0, %arg2 : i32, i32
  }
  func.func @transform_1(%arg0: i32, %arg1: i32, %arg2: i32) -> (i32, i32) {
    %c0_i32 = arith.constant 0 : i32
    return %arg2, %arg1 : i32, i32
  }
  func.func @transform_2(%arg0: i32, %arg1: i32, %arg2: i32) -> (i32, i32) {
    %c0_i32 = arith.constant 0 : i32
    %c0_i32_0 = arith.constant 0 : i32
    return %c0_i32, %arg1 : i32, i32
  }
  func.func @transform_3(%arg0: i32, %arg1: i32, %arg2: i32) -> (i32, i32) {
    %c0_i32 = arith.constant 0 : i32
    return %arg0, %arg1 : i32, i32
  }
}

module attributes {stable_mosaic.version = 11 : i64} {
  func.func @_add_ln_kernel(%arg0: i32, %arg1: memref<16x64xbf16, #tpu.memory_space<vmem>>, %arg2: memref<16x64xbf16, #tpu.memory_space<vmem>>, %arg3: memref<1x64xf32, #tpu.memory_space<vmem>>, %arg4: memref<1x64xf32, #tpu.memory_space<vmem>>, %arg5: memref<16x64xbf16, #tpu.memory_space<vmem>>) attributes {dimension_semantics = [#tpu.dimension_semantics<parallel>], iteration_bounds = array<i64: 1>, scalar_prefetch = 0 : i64, scratch_operands = 0 : i64, tpu.core_type = #tpu.core_type<tc>, window_params = [{transform_indices = @transform_0, window_bounds = array<i64: 16, 64>}, {transform_indices = @transform_1, window_bounds = array<i64: 16, 64>}, {pipeline_mode = #tpu.pipeline_mode<synchronous>, transform_indices = @transform_2, window_bounds = array<i64: 1, 64>}, {pipeline_mode = #tpu.pipeline_mode<synchronous>, transform_indices = @transform_3, window_bounds = array<i64: 1, 64>}, {transform_indices = @transform_4, window_bounds = array<i64: 16, 64>}]} {
    %c0 = arith.constant 0 : index
    %c0_0 = arith.constant 0 : index
    %0 = vector.load %arg1[%c0, %c0_0] : memref<16x64xbf16, #tpu.memory_space<vmem>>, vector<16x64xbf16>
    %1 = arith.extf %0 : vector<16x64xbf16> to vector<16x64xf32>
    %c0_1 = arith.constant 0 : index
    %c0_2 = arith.constant 0 : index
    %2 = vector.load %arg2[%c0_1, %c0_2] : memref<16x64xbf16, #tpu.memory_space<vmem>>, vector<16x64xbf16>
    %3 = arith.extf %2 : vector<16x64xbf16> to vector<16x64xf32>
    %4 = arith.addf %1, %3 : vector<16x64xf32>
    %cst = arith.constant dense<0.000000e+00> : vector<16xf32>
    %5 = vector.multi_reduction <add>, %4, %cst [1] : vector<16x64xf32> to vector<16xf32>
    %6 = vector.shape_cast %5 : vector<16xf32> to vector<16x1xf32>
    %cst_3 = arith.constant 6.400000e+01 : f32
    %7 = vector.broadcast %cst_3 : f32 to vector<16x1xf32>
    %8 = arith.divf %6, %7 : vector<16x1xf32>
    %9 = vector.broadcast %8 : vector<16x1xf32> to vector<16x64xf32>
    %10 = arith.subf %4, %9 : vector<16x64xf32>
    %11 = arith.mulf %10, %10 : vector<16x64xf32>
    %cst_4 = arith.constant dense<0.000000e+00> : vector<16xf32>
    %12 = vector.multi_reduction <add>, %11, %cst_4 [1] : vector<16x64xf32> to vector<16xf32>
    %13 = vector.shape_cast %12 : vector<16xf32> to vector<16x1xf32>
    %cst_5 = arith.constant 6.400000e+01 : f32
    %14 = vector.broadcast %cst_5 : f32 to vector<16x1xf32>
    %15 = arith.divf %13, %14 : vector<16x1xf32>
    %16 = vector.broadcast %8 : vector<16x1xf32> to vector<16x64xf32>
    %17 = arith.subf %4, %16 : vector<16x64xf32>
    %cst_6 = arith.constant 9.99999996E-13 : f32
    %18 = vector.broadcast %cst_6 : f32 to vector<16x1xf32>
    %19 = arith.addf %15, %18 : vector<16x1xf32>
    %20 = math.rsqrt %19 : vector<16x1xf32>
    %21 = vector.broadcast %20 : vector<16x1xf32> to vector<16x64xf32>
    %22 = arith.mulf %17, %21 : vector<16x64xf32>
    %c0_7 = arith.constant 0 : index
    %c0_8 = arith.constant 0 : index
    %23 = vector.load %arg3[%c0_7, %c0_8] : memref<1x64xf32, #tpu.memory_space<vmem>>, vector<1x64xf32>
    %24 = vector.broadcast %23 : vector<1x64xf32> to vector<16x64xf32>
    %25 = arith.mulf %22, %24 : vector<16x64xf32>
    %c0_9 = arith.constant 0 : index
    %c0_10 = arith.constant 0 : index
    %26 = vector.load %arg4[%c0_9, %c0_10] : memref<1x64xf32, #tpu.memory_space<vmem>>, vector<1x64xf32>
    %27 = vector.broadcast %26 : vector<1x64xf32> to vector<16x64xf32>
    %28 = arith.addf %25, %27 : vector<16x64xf32>
    %29 = arith.truncf %28 : vector<16x64xf32> to vector<16x64xbf16>
    %c0_11 = arith.constant 0 : index
    %c0_12 = arith.constant 0 : index
    %30 = vector.load %arg5[%c0_11, %c0_12] : memref<16x64xbf16, #tpu.memory_space<vmem>>, vector<16x64xbf16>
    tpu.vector_store %arg5[%c0_11, %c0_12], %29 {strides = array<i32>} : memref<16x64xbf16, #tpu.memory_space<vmem>>, vector<16x64xbf16>,
    return
  }
  func.func @transform_0(%arg0: i32) -> (i32, i32) {
    %c0_i32 = arith.constant 0 : i32
    %c0_i32_0 = arith.constant 0 : i32
    return %arg0, %c0_i32 : i32, i32
  }
  func.func @transform_1(%arg0: i32) -> (i32, i32) {
    %c0_i32 = arith.constant 0 : i32
    %c0_i32_0 = arith.constant 0 : i32
    return %arg0, %c0_i32 : i32, i32
  }
  func.func @transform_2(%arg0: i32) -> (i32, i32) {
    %c0_i32 = arith.constant 0 : i32
    %c0_i32_0 = arith.constant 0 : i32
    %c0_i32_1 = arith.constant 0 : i32
    return %c0_i32, %c0_i32_0 : i32, i32
  }
  func.func @transform_3(%arg0: i32) -> (i32, i32) {
    %c0_i32 = arith.constant 0 : i32
    %c0_i32_0 = arith.constant 0 : i32
    %c0_i32_1 = arith.constant 0 : i32
    return %c0_i32, %c0_i32_0 : i32, i32
  }
  func.func @transform_4(%arg0: i32) -> (i32, i32) {
    %c0_i32 = arith.constant 0 : i32
    %c0_i32_0 = arith.constant 0 : i32
    return %arg0, %c0_i32 : i32, i32
  }
}

module attributes {stable_mosaic.version = 11 : i64} {
  func.func @_linear_kernel(%arg0: i32, %arg1: i32, %arg2: i32, %arg3: memref<16x128xbf16, #tpu.memory_space<vmem>>, %arg4: memref<128x128xbf16, #tpu.memory_space<vmem>>, %arg5: memref<1x128xf32, #tpu.memory_space<vmem>>, %arg6: memref<16x128xbf16, #tpu.memory_space<vmem>>, %arg7: memref<16x128xf32, #tpu.memory_space<vmem>>) attributes {dimension_semantics = [#tpu.dimension_semantics<parallel>, #tpu.dimension_semantics<parallel>, #tpu.dimension_semantics<arbitrary>], iteration_bounds = array<i64: 1, 1, 1>, scalar_prefetch = 0 : i64, scratch_operands = 1 : i64, tpu.core_type = #tpu.core_type<tc>, window_params = [{transform_indices = @transform_0, window_bounds = array<i64: 16, 128>}, {transform_indices = @transform_1, window_bounds = array<i64: 128, 128>}, {transform_indices = @transform_2, window_bounds = array<i64: 1, 128>}, {transform_indices = @transform_3, window_bounds = array<i64: 16, 128>}]} {
    %c0_i32 = arith.constant 0 : i32
    %0 = arith.cmpi eq, %arg2, %c0_i32 : i32
    %1 = arith.extui %0 : i1 to i32
    %c0_i32_0 = arith.constant 0 : i32
    %2 = arith.cmpi ne, %1, %c0_i32_0 : i32
    scf.if %2 {
      %cst_10 = arith.constant 0.000000e+00 : f32
      %12 = vector.broadcast %cst_10 : f32 to vector<16x128xf32>
      %c0_11 = arith.constant 0 : index
      %c0_12 = arith.constant 0 : index
      %13 = vector.load %arg7[%c0_11, %c0_12] : memref<16x128xf32, #tpu.memory_space<vmem>>, vector<16x128xf32>
      tpu.vector_store %arg7[%c0_11, %c0_12], %12 {strides = array<i32>} : memref<16x128xf32, #tpu.memory_space<vmem>>, vector<16x128xf32>,
    } else {
    }
    %c0 = arith.constant 0 : index
    %c0_1 = arith.constant 0 : index
    %3 = vector.load %arg7[%c0, %c0_1] : memref<16x128xf32, #tpu.memory_space<vmem>>, vector<16x128xf32>
    %c0_2 = arith.constant 0 : index
    %c0_3 = arith.constant 0 : index
    %4 = vector.load %arg3[%c0_2, %c0_3] : memref<16x128xbf16, #tpu.memory_space<vmem>>, vector<16x128xbf16>
    %c0_4 = arith.constant 0 : index
    %c0_5 = arith.constant 0 : index
    %5 = vector.load %arg4[%c0_4, %c0_5] : memref<128x128xbf16, #tpu.memory_space<vmem>>, vector<128x128xbf16>
    %cst = arith.constant dense<0.000000e+00> : vector<16x128xf32>
    %6 = tpu.matmul %4, %5, %cst {dimension_numbers = #tpu.dot_dimension_numbers<[1], [0], [0], [1], [0, 0, 1, 1], [], []>} : vector<16x128xbf16>, vector<128x128xbf16>, vector<16x128xf32> -> vector<16x128xf32>
    %7 = arith.addf %3, %6 : vector<16x128xf32>
    %c0_6 = arith.constant 0 : index
    %c0_7 = arith.constant 0 : index
    %8 = vector.load %arg7[%c0_6, %c0_7] : memref<16x128xf32, #tpu.memory_space<vmem>>, vector<16x128xf32>
    tpu.vector_store %arg7[%c0_6, %c0_7], %7 {strides = array<i32>} : memref<16x128xf32, #tpu.memory_space<vmem>>, vector<16x128xf32>,
    %c0_i32_8 = arith.constant 0 : i32
    %9 = arith.cmpi eq, %arg2, %c0_i32_8 : i32
    %10 = arith.extui %9 : i1 to i32
    %c0_i32_9 = arith.constant 0 : i32
    %11 = arith.cmpi ne, %10, %c0_i32_9 : i32
    scf.if %11 {
      %c0_10 = arith.constant 0 : index
      %c0_11 = arith.constant 0 : index
      %12 = vector.load %arg7[%c0_10, %c0_11] : memref<16x128xf32, #tpu.memory_space<vmem>>, vector<16x128xf32>
      %c0_12 = arith.constant 0 : index
      %c0_13 = arith.constant 0 : index
      %13 = vector.load %arg5[%c0_12, %c0_13] : memref<1x128xf32, #tpu.memory_space<vmem>>, vector<1x128xf32>
      %14 = vector.broadcast %13 : vector<1x128xf32> to vector<16x128xf32>
      %15 = arith.addf %12, %14 : vector<16x128xf32>
      %cst_14 = arith.constant 5.000000e-01 : f32
      %16 = vector.broadcast %cst_14 : f32 to vector<16x128xf32>
      %17 = arith.mulf %16, %15 : vector<16x128xf32>
      %cst_15 = arith.constant 4.471500e-02 : f32
      %18 = vector.broadcast %cst_15 : f32 to vector<16x128xf32>
      %19 = arith.mulf %18, %15 : vector<16x128xf32>
      %20 = arith.mulf %19, %15 : vector<16x128xf32>
      %21 = arith.mulf %20, %15 : vector<16x128xf32>
      %22 = arith.addf %15, %21 : vector<16x128xf32>
      %cst_16 = arith.constant 0.797884583 : f32
      %23 = vector.broadcast %cst_16 : f32 to vector<16x128xf32>
      %24 = arith.mulf %23, %22 : vector<16x128xf32>
      %25 = math.tanh %24 : vector<16x128xf32>
      %cst_17 = arith.constant 1.000000e+00 : f32
      %26 = vector.broadcast %cst_17 : f32 to vector<16x128xf32>
      %27 = arith.addf %26, %25 : vector<16x128xf32>
      %28 = arith.mulf %17, %27 : vector<16x128xf32>
      %29 = arith.truncf %28 : vector<16x128xf32> to vector<16x128xbf16>
      %c0_18 = arith.constant 0 : index
      %c0_19 = arith.constant 0 : index
      %30 = vector.load %arg6[%c0_18, %c0_19] : memref<16x128xbf16, #tpu.memory_space<vmem>>, vector<16x128xbf16>
      tpu.vector_store %arg6[%c0_18, %c0_19], %29 {strides = array<i32>} : memref<16x128xbf16, #tpu.memory_space<vmem>>, vector<16x128xbf16>,
    } else {
    }
    return
  }
  func.func @transform_0(%arg0: i32, %arg1: i32, %arg2: i32) -> (i32, i32) {
    %c0_i32 = arith.constant 0 : i32
    return %arg0, %arg2 : i32, i32
  }
  func.func @transform_1(%arg0: i32, %arg1: i32, %arg2: i32) -> (i32, i32) {
    %c0_i32 = arith.constant 0 : i32
    return %arg2, %arg1 : i32, i32
  }
  func.func @transform_2(%arg0: i32, %arg1: i32, %arg2: i32) -> (i32, i32) {
    %c0_i32 = arith.constant 0 : i32
    %c0_i32_0 = arith.constant 0 : i32
    return %c0_i32, %arg1 : i32, i32
  }
  func.func @transform_3(%arg0: i32, %arg1: i32, %arg2: i32) -> (i32, i32) {
    %c0_i32 = arith.constant 0 : i32
    return %arg0, %arg1 : i32, i32
  }
}

module attributes {stable_mosaic.version = 11 : i64} {
  func.func @_linear_kernel(%arg0: i32, %arg1: i32, %arg2: i32, %arg3: memref<8x128xbf16, #tpu.memory_space<vmem>>, %arg4: memref<128x128xbf16, #tpu.memory_space<vmem>>, %arg5: memref<1x128xf32, #tpu.memory_space<vmem>>, %arg6: memref<8x128xf32, #tpu.memory_space<vmem>>, %arg7: memref<8x128xf32, #tpu.memory_space<vmem>>) attributes {dimension_semantics = [#tpu.dimension_semantics<parallel>, #tpu.dimension_semantics<parallel>, #tpu.dimension_semantics<arbitrary>], iteration_bounds = array<i64: 1, 1, 1>, scalar_prefetch = 0 : i64, scratch_operands = 1 : i64, tpu.core_type = #tpu.core_type<tc>, window_params = [{transform_indices = @transform_0, window_bounds = array<i64: 8, 128>}, {transform_indices = @transform_1, window_bounds = array<i64: 128, 128>}, {transform_indices = @transform_2, window_bounds = array<i64: 1, 128>}, {transform_indices = @transform_3, window_bounds = array<i64: 8, 128>}]} {
    %c0_i32 = arith.constant 0 : i32
    %0 = arith.cmpi eq, %arg2, %c0_i32 : i32
    %1 = arith.extui %0 : i1 to i32
    %c0_i32_0 = arith.constant 0 : i32
    %2 = arith.cmpi ne, %1, %c0_i32_0 : i32
    scf.if %2 {
      %cst_10 = arith.constant 0.000000e+00 : f32
      %12 = vector.broadcast %cst_10 : f32 to vector<8x128xf32>
      %c0_11 = arith.constant 0 : index
      %c0_12 = arith.constant 0 : index
      %13 = vector.load %arg7[%c0_11, %c0_12] : memref<8x128xf32, #tpu.memory_space<vmem>>, vector<8x128xf32>
      tpu.vector_store %arg7[%c0_11, %c0_12], %12 {strides = array<i32>} : memref<8x128xf32, #tpu.memory_space<vmem>>, vector<8x128xf32>,
    } else {
    }
    %c0 = arith.constant 0 : index
    %c0_1 = arith.constant 0 : index
    %3 = vector.load %arg7[%c0, %c0_1] : memref<8x128xf32, #tpu.memory_space<vmem>>, vector<8x128xf32>
    %c0_2 = arith.constant 0 : index
    %c0_3 = arith.constant 0 : index
    %4 = vector.load %arg3[%c0_2, %c0_3] : memref<8x128xbf16, #tpu.memory_space<vmem>>, vector<8x128xbf16>
    %c0_4 = arith.constant 0 : index
    %c0_5 = arith.constant 0 : index
    %5 = vector.load %arg4[%c0_4, %c0_5] : memref<128x128xbf16, #tpu.memory_space<vmem>>, vector<128x128xbf16>
    %cst = arith.constant dense<0.000000e+00> : vector<8x128xf32>
    %6 = tpu.matmul %4, %5, %cst {dimension_numbers = #tpu.dot_dimension_numbers<[1], [0], [0], [1], [0, 0, 1, 1], [], []>} : vector<8x128xbf16>, vector<128x128xbf16>, vector<8x128xf32> -> vector<8x128xf32>
    %7 = arith.addf %3, %6 : vector<8x128xf32>
    %c0_6 = arith.constant 0 : index
    %c0_7 = arith.constant 0 : index
    %8 = vector.load %arg7[%c0_6, %c0_7] : memref<8x128xf32, #tpu.memory_space<vmem>>, vector<8x128xf32>
    tpu.vector_store %arg7[%c0_6, %c0_7], %7 {strides = array<i32>} : memref<8x128xf32, #tpu.memory_space<vmem>>, vector<8x128xf32>,
    %c0_i32_8 = arith.constant 0 : i32
    %9 = arith.cmpi eq, %arg2, %c0_i32_8 : i32
    %10 = arith.extui %9 : i1 to i32
    %c0_i32_9 = arith.constant 0 : i32
    %11 = arith.cmpi ne, %10, %c0_i32_9 : i32
    scf.if %11 {
      %c0_10 = arith.constant 0 : index
      %c0_11 = arith.constant 0 : index
      %12 = vector.load %arg7[%c0_10, %c0_11] : memref<8x128xf32, #tpu.memory_space<vmem>>, vector<8x128xf32>
      %c0_12 = arith.constant 0 : index
      %c0_13 = arith.constant 0 : index
      %13 = vector.load %arg5[%c0_12, %c0_13] : memref<1x128xf32, #tpu.memory_space<vmem>>, vector<1x128xf32>
      %14 = vector.broadcast %13 : vector<1x128xf32> to vector<8x128xf32>
      %15 = arith.addf %12, %14 : vector<8x128xf32>
      %16 = math.tanh %15 : vector<8x128xf32>
      %c0_14 = arith.constant 0 : index
      %c0_15 = arith.constant 0 : index
      %17 = vector.load %arg6[%c0_14, %c0_15] : memref<8x128xf32, #tpu.memory_space<vmem>>, vector<8x128xf32>
      tpu.vector_store %arg6[%c0_14, %c0_15], %16 {strides = array<i32>} : memref<8x128xf32, #tpu.memory_space<vmem>>, vector<8x128xf32>,
    } else {
    }
    return
  }
  func.func @transform_0(%arg0: i32, %arg1: i32, %arg2: i32) -> (i32, i32) {
    %c0_i32 = arith.constant 0 : i32
    return %arg0, %arg2 : i32, i32
  }
  func.func @transform_1(%arg0: i32, %arg1: i32, %arg2: i32) -> (i32, i32) {
    %c0_i32 = arith.constant 0 : i32
    return %arg2, %arg1 : i32, i32
  }
  func.func @transform_2(%arg0: i32, %arg1: i32, %arg2: i32) -> (i32, i32) {
    %c0_i32 = arith.constant 0 : i32
    %c0_i32_0 = arith.constant 0 : i32
    return %c0_i32, %arg1 : i32, i32
  }
  func.func @transform_3(%arg0: i32, %arg1: i32, %arg2: i32) -> (i32, i32) {
    %c0_i32 = arith.constant 0 : i32
    return %arg0, %arg1 : i32, i32
  }
}

module attributes {stable_mosaic.version = 11 : i64} {
  func.func @_ln_kernel(%arg0: i32, %arg1: memref<16x64xbf16, #tpu.memory_space<vmem>>, %arg2: memref<1x64xf32, #tpu.memory_space<vmem>>, %arg3: memref<1x64xf32, #tpu.memory_space<vmem>>, %arg4: memref<16x64xbf16, #tpu.memory_space<vmem>>) attributes {dimension_semantics = [#tpu.dimension_semantics<parallel>], iteration_bounds = array<i64: 1>, scalar_prefetch = 0 : i64, scratch_operands = 0 : i64, tpu.core_type = #tpu.core_type<tc>, window_params = [{transform_indices = @transform_0, window_bounds = array<i64: 16, 64>}, {pipeline_mode = #tpu.pipeline_mode<synchronous>, transform_indices = @transform_1, window_bounds = array<i64: 1, 64>}, {pipeline_mode = #tpu.pipeline_mode<synchronous>, transform_indices = @transform_2, window_bounds = array<i64: 1, 64>}, {transform_indices = @transform_3, window_bounds = array<i64: 16, 64>}]} {
    %c0 = arith.constant 0 : index
    %c0_0 = arith.constant 0 : index
    %0 = vector.load %arg1[%c0, %c0_0] : memref<16x64xbf16, #tpu.memory_space<vmem>>, vector<16x64xbf16>
    %1 = arith.extf %0 : vector<16x64xbf16> to vector<16x64xf32>
    %cst = arith.constant dense<0.000000e+00> : vector<16xf32>
    %2 = vector.multi_reduction <add>, %1, %cst [1] : vector<16x64xf32> to vector<16xf32>
    %3 = vector.shape_cast %2 : vector<16xf32> to vector<16x1xf32>
    %cst_1 = arith.constant 6.400000e+01 : f32
    %4 = vector.broadcast %cst_1 : f32 to vector<16x1xf32>
    %5 = arith.divf %3, %4 : vector<16x1xf32>
    %6 = vector.broadcast %5 : vector<16x1xf32> to vector<16x64xf32>
    %7 = arith.subf %1, %6 : vector<16x64xf32>
    %8 = arith.mulf %7, %7 : vector<16x64xf32>
    %cst_2 = arith.constant dense<0.000000e+00> : vector<16xf32>
    %9 = vector.multi_reduction <add>, %8, %cst_2 [1] : vector<16x64xf32> to vector<16xf32>
    %10 = vector.shape_cast %9 : vector<16xf32> to vector<16x1xf32>
    %cst_3 = arith.constant 6.400000e+01 : f32
    %11 = vector.broadcast %cst_3 : f32 to vector<16x1xf32>
    %12 = arith.divf %10, %11 : vector<16x1xf32>
    %13 = vector.broadcast %5 : vector<16x1xf32> to vector<16x64xf32>
    %14 = arith.subf %1, %13 : vector<16x64xf32>
    %cst_4 = arith.constant 9.99999996E-13 : f32
    %15 = vector.broadcast %cst_4 : f32 to vector<16x1xf32>
    %16 = arith.addf %12, %15 : vector<16x1xf32>
    %17 = math.rsqrt %16 : vector<16x1xf32>
    %18 = vector.broadcast %17 : vector<16x1xf32> to vector<16x64xf32>
    %19 = arith.mulf %14, %18 : vector<16x64xf32>
    %c0_5 = arith.constant 0 : index
    %c0_6 = arith.constant 0 : index
    %20 = vector.load %arg2[%c0_5, %c0_6] : memref<1x64xf32, #tpu.memory_space<vmem>>, vector<1x64xf32>
    %21 = vector.broadcast %20 : vector<1x64xf32> to vector<16x64xf32>
    %22 = arith.mulf %19, %21 : vector<16x64xf32>
    %c0_7 = arith.constant 0 : index
    %c0_8 = arith.constant 0 : index
    %23 = vector.load %arg3[%c0_7, %c0_8] : memref<1x64xf32, #tpu.memory_space<vmem>>, vector<1x64xf32>
    %24 = vector.broadcast %23 : vector<1x64xf32> to vector<16x64xf32>
    %25 = arith.addf %22, %24 : vector<16x64xf32>
    %26 = arith.truncf %25 : vector<16x64xf32> to vector<16x64xbf16>
    %c0_9 = arith.constant 0 : index
    %c0_10 = arith.constant 0 : index
    %27 = vector.load %arg4[%c0_9, %c0_10] : memref<16x64xbf16, #tpu.memory_space<vmem>>, vector<16x64xbf16>
    tpu.vector_store %arg4[%c0_9, %c0_10], %26 {strides = array<i32>} : memref<16x64xbf16, #tpu.memory_space<vmem>>, vector<16x64xbf16>,
    return
  }
  func.func @transform_0(%arg0: i32) -> (i32, i32) {
    %c0_i32 = arith.constant 0 : i32
    %c0_i32_0 = arith.constant 0 : i32
    return %arg0, %c0_i32 : i32, i32
  }
  func.func @transform_1(%arg0: i32) -> (i32, i32) {
    %c0_i32 = arith.constant 0 : i32
    %c0_i32_0 = arith.constant 0 : i32
    %c0_i32_1 = arith.constant 0 : i32
    return %c0_i32, %c0_i32_0 : i32, i32
  }
  func.func @transform_2(%arg0: i32) -> (i32, i32) {
    %c0_i32 = arith.constant 0 : i32
    %c0_i32_0 = arith.constant 0 : i32
    %c0_i32_1 = arith.constant 0 : i32
    return %c0_i32, %c0_i32_0 : i32, i32
  }
  func.func @transform_3(%arg0: i32) -> (i32, i32) {
    %c0_i32 = arith.constant 0 : i32
    %c0_i32_0 = arith.constant 0 : i32
    return %arg0, %c0_i32 : i32, i32
  }
}

module attributes {stable_mosaic.version = 11 : i64} {
  func.func @_linear_kernel(%arg0: i32, %arg1: i32, %arg2: i32, %arg3: memref<8x128xbf16, #tpu.memory_space<vmem>>, %arg4: memref<128x128xbf16, #tpu.memory_space<vmem>>, %arg5: memref<1x128xf32, #tpu.memory_space<vmem>>, %arg6: memref<8x128xf32, #tpu.memory_space<vmem>>, %arg7: memref<8x128xf32, #tpu.memory_space<vmem>>) attributes {dimension_semantics = [#tpu.dimension_semantics<parallel>, #tpu.dimension_semantics<parallel>, #tpu.dimension_semantics<arbitrary>], iteration_bounds = array<i64: 1, 1, 1>, scalar_prefetch = 0 : i64, scratch_operands = 1 : i64, tpu.core_type = #tpu.core_type<tc>, window_params = [{transform_indices = @transform_0, window_bounds = array<i64: 8, 128>}, {transform_indices = @transform_1, window_bounds = array<i64: 128, 128>}, {transform_indices = @transform_2, window_bounds = array<i64: 1, 128>}, {transform_indices = @transform_3, window_bounds = array<i64: 8, 128>}]} {
    %c0_i32 = arith.constant 0 : i32
    %0 = arith.cmpi eq, %arg2, %c0_i32 : i32
    %1 = arith.extui %0 : i1 to i32
    %c0_i32_0 = arith.constant 0 : i32
    %2 = arith.cmpi ne, %1, %c0_i32_0 : i32
    scf.if %2 {
      %cst_10 = arith.constant 0.000000e+00 : f32
      %12 = vector.broadcast %cst_10 : f32 to vector<8x128xf32>
      %c0_11 = arith.constant 0 : index
      %c0_12 = arith.constant 0 : index
      %13 = vector.load %arg7[%c0_11, %c0_12] : memref<8x128xf32, #tpu.memory_space<vmem>>, vector<8x128xf32>
      tpu.vector_store %arg7[%c0_11, %c0_12], %12 {strides = array<i32>} : memref<8x128xf32, #tpu.memory_space<vmem>>, vector<8x128xf32>,
    } else {
    }
    %c0 = arith.constant 0 : index
    %c0_1 = arith.constant 0 : index
    %3 = vector.load %arg7[%c0, %c0_1] : memref<8x128xf32, #tpu.memory_space<vmem>>, vector<8x128xf32>
    %c0_2 = arith.constant 0 : index
    %c0_3 = arith.constant 0 : index
    %4 = vector.load %arg3[%c0_2, %c0_3] : memref<8x128xbf16, #tpu.memory_space<vmem>>, vector<8x128xbf16>
    %c0_4 = arith.constant 0 : index
    %c0_5 = arith.constant 0 : index
    %5 = vector.load %arg4[%c0_4, %c0_5] : memref<128x128xbf16, #tpu.memory_space<vmem>>, vector<128x128xbf16>
    %cst = arith.constant dense<0.000000e+00> : vector<8x128xf32>
    %6 = tpu.matmul %4, %5, %cst {dimension_numbers = #tpu.dot_dimension_numbers<[1], [0], [0], [1], [0, 0, 1, 1], [], []>} : vector<8x128xbf16>, vector<128x128xbf16>, vector<8x128xf32> -> vector<8x128xf32>
    %7 = arith.addf %3, %6 : vector<8x128xf32>
    %c0_6 = arith.constant 0 : index
    %c0_7 = arith.constant 0 : index
    %8 = vector.load %arg7[%c0_6, %c0_7] : memref<8x128xf32, #tpu.memory_space<vmem>>, vector<8x128xf32>
    tpu.vector_store %arg7[%c0_6, %c0_7], %7 {strides = array<i32>} : memref<8x128xf32, #tpu.memory_space<vmem>>, vector<8x128xf32>,
    %c0_i32_8 = arith.constant 0 : i32
    %9 = arith.cmpi eq, %arg2, %c0_i32_8 : i32
    %10 = arith.extui %9 : i1 to i32
    %c0_i32_9 = arith.constant 0 : i32
    %11 = arith.cmpi ne, %10, %c0_i32_9 : i32
    scf.if %11 {
      %c0_10 = arith.constant 0 : index
      %c0_11 = arith.constant 0 : index
      %12 = vector.load %arg7[%c0_10, %c0_11] : memref<8x128xf32, #tpu.memory_space<vmem>>, vector<8x128xf32>
      %c0_12 = arith.constant 0 : index
      %c0_13 = arith.constant 0 : index
      %13 = vector.load %arg5[%c0_12, %c0_13] : memref<1x128xf32, #tpu.memory_space<vmem>>, vector<1x128xf32>
      %14 = vector.broadcast %13 : vector<1x128xf32> to vector<8x128xf32>
      %15 = arith.addf %12, %14 : vector<8x128xf32>
      %c0_14 = arith.constant 0 : index
      %c0_15 = arith.constant 0 : index
      %16 = vector.load %arg6[%c0_14, %c0_15] : memref<8x128xf32, #tpu.memory_space<vmem>>, vector<8x128xf32>
      tpu.vector_store %arg6[%c0_14, %c0_15], %15 {strides = array<i32>} : memref<8x128xf32, #tpu.memory_space<vmem>>, vector<8x128xf32>,
    } else {
    }
    return
  }
  func.func @transform_0(%arg0: i32, %arg1: i32, %arg2: i32) -> (i32, i32) {
    %c0_i32 = arith.constant 0 : i32
    return %arg0, %arg2 : i32, i32
  }
  func.func @transform_1(%arg0: i32, %arg1: i32, %arg2: i32) -> (i32, i32) {
    %c0_i32 = arith.constant 0 : i32
    return %arg2, %arg1 : i32, i32
  }
  func.func @transform_2(%arg0: i32, %arg1: i32, %arg2: i32) -> (i32, i32) {
    %c0_i32 = arith.constant 0 : i32
    %c0_i32_0 = arith.constant 0 : i32
    return %c0_i32, %arg1 : i32, i32
  }
  func.func @transform_3(%arg0: i32, %arg1: i32, %arg2: i32) -> (i32, i32) {
    %c0_i32 = arith.constant 0 : i32
    return %arg0, %arg1 : i32, i32
  }
}

module attributes {stable_mosaic.version = 11 : i64} {
  func.func @_linear_kernel(%arg0: i32, %arg1: i32, %arg2: i32, %arg3: memref<16x128xbf16, #tpu.memory_space<vmem>>, %arg4: memref<128x128xbf16, #tpu.memory_space<vmem>>, %arg5: memref<1x128xf32, #tpu.memory_space<vmem>>, %arg6: memref<16x128xf32, #tpu.memory_space<vmem>>, %arg7: memref<16x128xf32, #tpu.memory_space<vmem>>) attributes {dimension_semantics = [#tpu.dimension_semantics<parallel>, #tpu.dimension_semantics<parallel>, #tpu.dimension_semantics<arbitrary>], iteration_bounds = array<i64: 1, 1, 1>, scalar_prefetch = 0 : i64, scratch_operands = 1 : i64, tpu.core_type = #tpu.core_type<tc>, window_params = [{transform_indices = @transform_0, window_bounds = array<i64: 16, 128>}, {transform_indices = @transform_1, window_bounds = array<i64: 128, 128>}, {transform_indices = @transform_2, window_bounds = array<i64: 1, 128>}, {transform_indices = @transform_3, window_bounds = array<i64: 16, 128>}]} {
    %c0_i32 = arith.constant 0 : i32
    %0 = arith.cmpi eq, %arg2, %c0_i32 : i32
    %1 = arith.extui %0 : i1 to i32
    %c0_i32_0 = arith.constant 0 : i32
    %2 = arith.cmpi ne, %1, %c0_i32_0 : i32
    scf.if %2 {
      %cst_10 = arith.constant 0.000000e+00 : f32
      %12 = vector.broadcast %cst_10 : f32 to vector<16x128xf32>
      %c0_11 = arith.constant 0 : index
      %c0_12 = arith.constant 0 : index
      %13 = vector.load %arg7[%c0_11, %c0_12] : memref<16x128xf32, #tpu.memory_space<vmem>>, vector<16x128xf32>
      tpu.vector_store %arg7[%c0_11, %c0_12], %12 {strides = array<i32>} : memref<16x128xf32, #tpu.memory_space<vmem>>, vector<16x128xf32>,
    } else {
    }
    %c0 = arith.constant 0 : index
    %c0_1 = arith.constant 0 : index
    %3 = vector.load %arg7[%c0, %c0_1] : memref<16x128xf32, #tpu.memory_space<vmem>>, vector<16x128xf32>
    %c0_2 = arith.constant 0 : index
    %c0_3 = arith.constant 0 : index
    %4 = vector.load %arg3[%c0_2, %c0_3] : memref<16x128xbf16, #tpu.memory_space<vmem>>, vector<16x128xbf16>
    %c0_4 = arith.constant 0 : index
    %c0_5 = arith.constant 0 : index
    %5 = vector.load %arg4[%c0_4, %c0_5] : memref<128x128xbf16, #tpu.memory_space<vmem>>, vector<128x128xbf16>
    %cst = arith.constant dense<0.000000e+00> : vector<16x128xf32>
    %6 = tpu.matmul %4, %5, %cst {dimension_numbers = #tpu.dot_dimension_numbers<[1], [0], [0], [1], [0, 0, 1, 1], [], []>} : vector<16x128xbf16>, vector<128x128xbf16>, vector<16x128xf32> -> vector<16x128xf32>
    %7 = arith.addf %3, %6 : vector<16x128xf32>
    %c0_6 = arith.constant 0 : index
    %c0_7 = arith.constant 0 : index
    %8 = vector.load %arg7[%c0_6, %c0_7] : memref<16x128xf32, #tpu.memory_space<vmem>>, vector<16x128xf32>
    tpu.vector_store %arg7[%c0_6, %c0_7], %7 {strides = array<i32>} : memref<16x128xf32, #tpu.memory_space<vmem>>, vector<16x128xf32>,
    %c0_i32_8 = arith.constant 0 : i32
    %9 = arith.cmpi eq, %arg2, %c0_i32_8 : i32
    %10 = arith.extui %9 : i1 to i32
    %c0_i32_9 = arith.constant 0 : i32
    %11 = arith.cmpi ne, %10, %c0_i32_9 : i32
    scf.if %11 {
      %c0_10 = arith.constant 0 : index
      %c0_11 = arith.constant 0 : index
      %12 = vector.load %arg7[%c0_10, %c0_11] : memref<16x128xf32, #tpu.memory_space<vmem>>, vector<16x128xf32>
      %c0_12 = arith.constant 0 : index
      %c0_13 = arith.constant 0 : index
      %13 = vector.load %arg5[%c0_12, %c0_13] : memref<1x128xf32, #tpu.memory_space<vmem>>, vector<1x128xf32>
      %14 = vector.broadcast %13 : vector<1x128xf32> to vector<16x128xf32>
      %15 = arith.addf %12, %14 : vector<16x128xf32>
      %c0_14 = arith.constant 0 : index
      %c0_15 = arith.constant 0 : index
      %16 = vector.load %arg6[%c0_14, %c0_15] : memref<16x128xf32, #tpu.memory_space<vmem>>, vector<16x128xf32>
      tpu.vector_store %arg6[%c0_14, %c0_15], %15 {strides = array<i32>} : memref<16x128xf32, #tpu.memory_space<vmem>>, vector<16x128xf32>,
    } else {
    }
    return
  }
  func.func @transform_0(%arg0: i32, %arg1: i32, %arg2: i32) -> (i32, i32) {
    %c0_i32 = arith.constant 0 : i32
    return %arg0, %arg2 : i32, i32
  }
  func.func @transform_1(%arg0: i32, %arg1: i32, %arg2: i32) -> (i32, i32) {
    %c0_i32 = arith.constant 0 : i32
    return %arg2, %arg1 : i32, i32
  }
  func.func @transform_2(%arg0: i32, %arg1: i32, %arg2: i32) -> (i32, i32) {
    %c0_i32 = arith.constant 0 : i32
    %c0_i32_0 = arith.constant 0 : i32
    return %c0_i32, %arg1 : i32, i32
  }
  func.func @transform_3(%arg0: i32, %arg1: i32, %arg2: i32) -> (i32, i32) {
    %c0_i32 = arith.constant 0 : i32
    return %arg0, %arg1 : i32, i32
  }
}

</mosaic_0001>

<llo_original>
// kernel: bert_for_pretraining.20
$region0: #{bert_for_pretraining.20}
  #allocation0 [shape = 'u32[]', space=smem, size = 0x4, offset = 0x4, fixed_abs, tag = 'smem constant byte address 0x4 - core index']
  #allocation1 [shape = 'u32[72,128]{1,0:T(1,128)}', space=vmem, size = 0x9000, scoped, tag = 'internal scratch']
  %s0 = inlined_call_operand.vmem [shape: f32[16,64], index: 0, kind: input, shape index: {}]
  %s1 = inlined_call_operand.vmem [shape: f32[1,64], index: 1, kind: input, shape index: {}]
  %s2 = inlined_call_operand.vmem [shape: f32[1,64], index: 2, kind: input, shape index: {}]
  %s3 = inlined_call_operand.vmem [shape: bf16[16,64], index: 3, kind: output, shape index: {}]
  %s4 = sld [smem:[#allocation0]]
  $region22: #{bert_for_pretraining.20} parent=0
    _
  %s6 = ssub.s32 1, %s4
  %s7 = scalar_select 0, %s6, %s4
  // Predicated region
  $region2: #{bert_for_pretraining.20} parent=0 // pred_check
    _
  $region3: #{bert_for_pretraining.20} parent=0 // pred_check_branch
    %9 = sbr.rel (0) target = $region5
  $region4: #{bert_for_pretraining.20} parent=0 // pred_region
    _
  $region5: #{bert_for_pretraining.20} parent=0 // pred_fallthru
    _
  // Predicated region
  $region6: #{bert_for_pretraining.20} parent=0 // pred_check
    _
  $region7: #{bert_for_pretraining.20} parent=0 // pred_check_branch
    %11 = sbr.rel (0) target = $region9
  $region8: #{bert_for_pretraining.20} parent=0 // pred_region
    _
  $region9: #{bert_for_pretraining.20} parent=0 // pred_fallthru
    _
  // Predicated region
  $region10: #{bert_for_pretraining.20} parent=0 // pred_check
    _
  $region11: #{bert_for_pretraining.20} parent=0 // pred_check_branch
    %13 = sbr.rel (0) target = $region13
  $region12: #{bert_for_pretraining.20} parent=0 // pred_region
    _
  $region13: #{bert_for_pretraining.20} parent=0 // pred_fallthru
    _
  %v14 = vld [vmem:[%s0] sm:$0xff]
  %v15 = vld [vmem:[%s0 + $0x8] sm:$0xff]
  %vm16 = vcmask 523264
  %v17 = vsel %vm16, %v14, 0.0
  %18 = vadd.xlane.f32.xlu0 %v17
  %v19 = vpop.xlane.xlu0 %18
  %v20 = vsel %vm16, %v15, 0.0
  %21 = vadd.xlane.f32.xlu0 %v20
  %v22 = vpop.xlane.xlu0 %21
  %v23 = vrcp.pop 64.0
  %v24 = vmul.f32 64.0, %v23
  %v25 = vsub.f32 1.0, %v24
  %v26 = vmul.f32 %v23, %v25
  %v27 = vadd.f32 %v23, %v26
  %vm28 = vweird.f32 %v23
  %v29 = vsel %vm28, %v23, %v27
  %v30 = vmul.f32 %v19, %v29
  %v31 = vmul.f32 %v22, %v29
  %v32 = vsub.f32 %v14, %v30
  %v33 = vsub.f32 %v15, %v31
  %v34 = vmul.f32 %v32, %v32
  %v35 = vmul.f32 %v33, %v33
  %v36 = vsel %vm16, %v34, 0.0
  %37 = vadd.xlane.f32.xlu0 %v36
  %v38 = vpop.xlane.xlu0 %37
  %v39 = vsel %vm16, %v35, 0.0
  %40 = vadd.xlane.f32.xlu0 %v39
  %v41 = vpop.xlane.xlu0 %40
  %v42 = vmul.f32 %v38, %v29
  %v43 = vmul.f32 %v41, %v29
  %v44 = vadd.f32 %v42, 1e-12
  %v45 = vadd.f32 %v43, 1e-12
  %v46 = vrsqrt.pop %v44
  %v47 = vmul.f32 %v46, %v44
  %v48 = vmul.f32 %v47, %v46
  %v49 = vmul.f32 0.5, %v48
  %v50 = vsub.f32 1.5, %v49
  %v51 = vmul.f32 %v46, %v50
  %vm52 = vweird.f32 %v44
  %vm53 = vweird.f32 %v46
  %vm54 = vmor %vm52, %vm53
  %v55 = vsel %vm54, %v46, %v51
  %v56 = vrsqrt.pop %v45
  %v57 = vmul.f32 %v56, %v45
  %v58 = vmul.f32 %v57, %v56
  %v59 = vmul.f32 0.5, %v58
  %v60 = vsub.f32 1.5, %v59
  %v61 = vmul.f32 %v56, %v60
  %vm62 = vweird.f32 %v45
  %vm63 = vweird.f32 %v56
  %vm64 = vmor %vm62, %vm63
  %v65 = vsel %vm64, %v56, %v61
  %v66 = vmul.f32 %v32, %v55
  %v67 = vmul.f32 %v33, %v65
  %v68 = vld [vmem:[%s1] sm:$0x1]
  %v70 = vperm.slane %v68, 0
  %v72 = vmul.f32 %v66, %v70
  %v73 = vmul.f32 %v67, %v70
  %v74 = vld [vmem:[%s2] sm:$0x1]
  %v76 = vperm.slane %v74, 0
  %v78 = vadd.f32 %v72, %v76
  %v79 = vadd.f32 %v73, %v76
  %v80 = vpack.c.bf16 %v78, %v78
  %v81 = vpack.c.bf16 %v79, %v79
  %vm82 = vcmask 519168
  %83 = vst.msk [vmem:[%s3] sm:$0xf] %vm82, %v80
  %84 = vst.msk [vmem:[%s3 + $0x4] sm:$0xf] %vm82, %v81
  // Predicated region
  $region14: #{bert_for_pretraining.20} parent=0 // pred_check
    _
  $region15: #{bert_for_pretraining.20} parent=0 // pred_check_branch
    %86 = sbr.rel (0) target = $region17
  $region16: #{bert_for_pretraining.20} parent=0 // pred_region
    _
  $region17: #{bert_for_pretraining.20} parent=0 // pred_fallthru
    _
  // Predicated region
  $region18: #{bert_for_pretraining.20} parent=0 // pred_check
    _
  $region19: #{bert_for_pretraining.20} parent=0 // pred_check_branch
    %88 = sbr.rel (0) target = $region21
  $region20: #{bert_for_pretraining.20} parent=0 // pred_region
    _
  $region21: #{bert_for_pretraining.20} parent=0 // pred_fallthru
    _

// kernel: bert_for_pretraining.21
$region0: #{bert_for_pretraining.21}
  #allocation0 [shape = 'u32[]', space=smem, size = 0x4, offset = 0x4, fixed_abs, tag = 'smem constant byte address 0x4 - core index']
  #allocation1 [shape = 'u32[72,128]{1,0:T(1,128)}', space=vmem, size = 0x9000, scoped, tag = 'internal scratch']
  #allocation2 [shape = 'f32[16,256]{1,0:T(8,128)}', space=vmem, size = 0x4000, scoped, tag = 'scratch operand']
  %s0 = inlined_call_operand.vmem [shape: bf16[16,128], index: 0, kind: input, shape index: {}]
  %s1 = inlined_call_operand.vmem [shape: bf16[128,256], index: 1, kind: input, shape index: {}]
  %s2 = inlined_call_operand.vmem [shape: f32[1,256], index: 2, kind: input, shape index: {}]
  %s3 = inlined_call_operand.vmem [shape: bf16[16,256], index: 3, kind: output, shape index: {}]
  %s4 = sld [smem:[#allocation0]]
  $region30: #{bert_for_pretraining.21} parent=0
    _
  %s6 = ssub.s32 1, %s4
  %s7 = scalar_select 0, %s6, %s4
  // Predicated region
  $region2: #{bert_for_pretraining.21} parent=0 // pred_check
    _
  $region3: #{bert_for_pretraining.21} parent=0 // pred_check_branch
    %9 = sbr.rel (0) target = $region5
  $region4: #{bert_for_pretraining.21} parent=0 // pred_region
    _
  $region5: #{bert_for_pretraining.21} parent=0 // pred_fallthru
    _
  // Predicated region
  $region6: #{bert_for_pretraining.21} parent=0 // pred_check
    _
  $region7: #{bert_for_pretraining.21} parent=0 // pred_check_branch
    %11 = sbr.rel (0) target = $region9
  $region8: #{bert_for_pretraining.21} parent=0 // pred_region
    _
  $region9: #{bert_for_pretraining.21} parent=0 // pred_fallthru
    _
  // Predicated region
  $region10: #{bert_for_pretraining.21} parent=0 // pred_check
    _
  $region11: #{bert_for_pretraining.21} parent=0 // pred_check_branch
    %13 = sbr.rel (0) target = $region13
  $region12: #{bert_for_pretraining.21} parent=0 // pred_region
    _
  $region13: #{bert_for_pretraining.21} parent=0 // pred_fallthru
    _
  %p14 = scmp.eq.s32.totalorder 0, 0
  // Predicated region
  $region14: #{bert_for_pretraining.21} parent=0 // pred_check
    %p15 = pneg %p14
  $region15: #{bert_for_pretraining.21} parent=0 // pred_check_branch
    %17 = sbr.rel (%p15) target = $region17
  $region16: #{bert_for_pretraining.21} parent=0 // pred_region
    %18 = vst [vmem:[#allocation2] sm:$0xff] 0.0
    %19 = vst [vmem:[#allocation2 + $0x8] sm:$0xff] 0.0
    %20 = vst [vmem:[#allocation2 + $0x10] sm:$0xff] 0.0
    %21 = vst [vmem:[#allocation2 + $0x18] sm:$0xff] 0.0
  $region17: #{bert_for_pretraining.21} parent=0 // pred_fallthru
    _
  %v22 = vld [vmem:[#allocation2] sm:$0xff]
  %v23 = vld [vmem:[#allocation2 + $0x8] sm:$0xff]
  %v24 = vld [vmem:[#allocation2 + $0x10] sm:$0xff]
  %v25 = vld [vmem:[#allocation2 + $0x18] sm:$0xff]
  %v26 = vld [vmem:[%s0] sm:$0xf]
  %v27 = vld [vmem:[%s0 + $0x4] sm:$0xf]
  %v28 = vld [vmem:[%s1] sm:$0xff]
  %v29 = vld [vmem:[%s1 + $0x8] sm:$0xff]
  %v30 = vld [vmem:[%s1 + $0x10] sm:$0xff]
  %v31 = vld [vmem:[%s1 + $0x18] sm:$0xff]
  %v32 = vld [vmem:[%s1 + $0x20] sm:$0xff]
  %v33 = vld [vmem:[%s1 + $0x28] sm:$0xff]
  %v34 = vld [vmem:[%s1 + $0x30] sm:$0xff]
  %v35 = vld [vmem:[%s1 + $0x38] sm:$0xff]
  %v36 = vld [vmem:[%s1 + $0x40] sm:$0xff]
  %v37 = vld [vmem:[%s1 + $0x48] sm:$0xff]
  %v38 = vld [vmem:[%s1 + $0x50] sm:$0xff]
  %v39 = vld [vmem:[%s1 + $0x58] sm:$0xff]
  %v40 = vld [vmem:[%s1 + $0x60] sm:$0xff]
  %v41 = vld [vmem:[%s1 + $0x68] sm:$0xff]
  %v42 = vld [vmem:[%s1 + $0x70] sm:$0xff]
  %v43 = vld [vmem:[%s1 + $0x78] sm:$0xff]
  %v46 = vunpack.c.l.b16 %v26
  %v47 = vunpack.c.l.b16 %v27
  %v48 = vpack.c.b16 %v47, %v46
  %v66 = vunpack.c.l.b16 %v28
  %v67 = vunpack.c.h.b16 %v28
  %v68 = vunpack.c.l.b16 %v29
  %v69 = vunpack.c.h.b16 %v29
  %v70 = vunpack.c.l.b16 %v30
  %v71 = vunpack.c.h.b16 %v30
  %v72 = vunpack.c.l.b16 %v31
  %v73 = vunpack.c.h.b16 %v31
  %v74 = vunpack.c.l.b16 %v32
  %v75 = vunpack.c.h.b16 %v32
  %v76 = vunpack.c.l.b16 %v33
  %v77 = vunpack.c.h.b16 %v33
  %v78 = vunpack.c.l.b16 %v34
  %v79 = vunpack.c.h.b16 %v34
  %v80 = vunpack.c.l.b16 %v35
  %v81 = vunpack.c.h.b16 %v35
  %v82 = vunpack.c.l.b16 %v36
  %v83 = vunpack.c.h.b16 %v36
  %v84 = vunpack.c.l.b16 %v37
  %v85 = vunpack.c.h.b16 %v37
  %v86 = vunpack.c.l.b16 %v38
  %v87 = vunpack.c.h.b16 %v38
  %v88 = vunpack.c.l.b16 %v39
  %v89 = vunpack.c.h.b16 %v39
  %v90 = vunpack.c.l.b16 %v40
  %v91 = vunpack.c.h.b16 %v40
  %v92 = vunpack.c.l.b16 %v41
  %v93 = vunpack.c.h.b16 %v41
  %v94 = vunpack.c.l.b16 %v42
  %v95 = vunpack.c.h.b16 %v42
  %v96 = vunpack.c.l.b16 %v43
  %v97 = vunpack.c.h.b16 %v43
  %v98 = vpack.c.b16 %v68, %v66
  %v99 = vpack.c.b16 %v69, %v67
  %v100 = vpack.c.b16 %v72, %v70
  %v101 = vpack.c.b16 %v73, %v71
  %v102 = vpack.c.b16 %v76, %v74
  %v103 = vpack.c.b16 %v77, %v75
  %v104 = vpack.c.b16 %v80, %v78
  %v105 = vpack.c.b16 %v81, %v79
  %v106 = vpack.c.b16 %v84, %v82
  %v107 = vpack.c.b16 %v85, %v83
  %v108 = vpack.c.b16 %v88, %v86
  %v109 = vpack.c.b16 %v89, %v87
  %v110 = vpack.c.b16 %v92, %v90
  %v111 = vpack.c.b16 %v93, %v91
  %v112 = vpack.c.b16 %v96, %v94
  %v113 = vpack.c.b16 %v97, %v95
  %130 = vmatpush.bf16.msra.mxu0 %v112
  %131 = vmatpush.bf16.msra.mxu0 %v110
  %132 = vmatpush.bf16.msra.mxu0 %v108
  %133 = vmatpush.bf16.msra.mxu0 %v106
  %134 = vmatpush.bf16.msra.mxu0 %v104
  %135 = vmatpush.bf16.msra.mxu0 %v102
  %136 = vmatpush.bf16.msra.mxu0 %v100
  %137 = vmatpush.bf16.msra.mxu0 %v98
  %138 = vmatmul.bf16.gmra.mxu0 %v48
  %v139 = vpop.f32.mrf.mxu0
  %v140 = vadd.f32 0.0, %v139
  %v141 = vpop.f32.mrf.mxu0
  %v142 = vadd.f32 0.0, %v141
  %143 = vdwg.mxu0
  %144 = vmatpush.bf16.msra.mxu0 %v113
  %145 = vmatpush.bf16.msra.mxu0 %v111
  %146 = vmatpush.bf16.msra.mxu0 %v109
  %147 = vmatpush.bf16.msra.mxu0 %v107
  %148 = vmatpush.bf16.msra.mxu0 %v105
  %149 = vmatpush.bf16.msra.mxu0 %v103
  %150 = vmatpush.bf16.msra.mxu0 %v101
  %151 = vmatpush.bf16.msra.mxu0 %v99
  %152 = vmatmul.bf16.gmra.mxu0 %v48
  %v153 = vpop.f32.mrf.mxu0
  %v154 = vadd.f32 0.0, %v153
  %v155 = vpop.f32.mrf.mxu0
  %v156 = vadd.f32 0.0, %v155
  %157 = vdwg.mxu0
  %v158 = vadd.f32 %v22, %v140
  %v159 = vadd.f32 %v23, %v154
  %v160 = vadd.f32 %v24, %v142
  %v161 = vadd.f32 %v25, %v156
  %162 = vst [vmem:[#allocation2] sm:$0xff] %v158
  %163 = vst [vmem:[#allocation2 + $0x8] sm:$0xff] %v159
  %164 = vst [vmem:[#allocation2 + $0x10] sm:$0xff] %v160
  %165 = vst [vmem:[#allocation2 + $0x18] sm:$0xff] %v161
  // Predicated region
  $region18: #{bert_for_pretraining.21} parent=0 // pred_check
    %p166 = pneg %p14
  $region19: #{bert_for_pretraining.21} parent=0 // pred_check_branch
    %168 = sbr.rel (%p166) target = $region21
  $region20: #{bert_for_pretraining.21} parent=0 // pred_region
    %v169 = vld [vmem:[#allocation2] sm:$0xff]
    %v170 = vld [vmem:[#allocation2 + $0x8] sm:$0xff]
    %v171 = vld [vmem:[#allocation2 + $0x10] sm:$0xff]
    %v172 = vld [vmem:[#allocation2 + $0x18] sm:$0xff]
    %v173 = vld [vmem:[%s2] sm:$0x3]
    %v175 = vperm.slane %v173, 0
    %v176 = vperm.slane %v173, 1
    %v179 = vadd.f32 %v169, %v175
    %v180 = vadd.f32 %v170, %v176
    %v181 = vadd.f32 %v171, %v175
    %v182 = vadd.f32 %v172, %v176
    %v183 = vpack.c.bf16 %v180, %v179
    %v184 = vpack.c.bf16 %v182, %v181
    %185 = vst [vmem:[%s3] sm:$0xff] %v183
    %186 = vst [vmem:[%s3 + $0x8] sm:$0xff] %v184
  $region21: #{bert_for_pretraining.21} parent=0 // pred_fallthru
    _
  // Predicated region
  $region22: #{bert_for_pretraining.21} parent=0 // pred_check
    _
  $region23: #{bert_for_pretraining.21} parent=0 // pred_check_branch
    %188 = sbr.rel (0) target = $region25
  $region24: #{bert_for_pretraining.21} parent=0 // pred_region
    _
  $region25: #{bert_for_pretraining.21} parent=0 // pred_fallthru
    _
  // Predicated region
  $region26: #{bert_for_pretraining.21} parent=0 // pred_check
    _
  $region27: #{bert_for_pretraining.21} parent=0 // pred_check_branch
    %190 = sbr.rel (0) target = $region29
  $region28: #{bert_for_pretraining.21} parent=0 // pred_region
    _
  $region29: #{bert_for_pretraining.21} parent=0 // pred_fallthru
    _

// kernel: bert_for_pretraining.23
$region0: #{bert_for_pretraining.23}
  #allocation0 [shape = 'u32[]', space=smem, size = 0x4, offset = 0x4, fixed_abs, tag = 'smem constant byte address 0x4 - core index']
  #allocation1 [shape = 'u32[72,128]{1,0:T(1,128)}', space=vmem, size = 0x9000, scoped, tag = 'internal scratch']
  #allocation2 [shape = 'f32[16,128]{1,0:T(8,128)}', space=vmem, size = 0x2000, scoped, tag = 'scratch operand']
  %s0 = inlined_call_operand.vmem [shape: bf16[16,128], index: 0, kind: input, shape index: {}]
  %s1 = inlined_call_operand.vmem [shape: bf16[128,128], index: 1, kind: input, shape index: {}]
  %s2 = inlined_call_operand.vmem [shape: f32[1,128], index: 2, kind: input, shape index: {}]
  %s3 = inlined_call_operand.vmem [shape: bf16[16,128], index: 3, kind: output, shape index: {}]
  %s4 = sld [smem:[#allocation0]]
  $region30: #{bert_for_pretraining.23} parent=0
    _
  %s6 = ssub.s32 1, %s4
  %s7 = scalar_select 0, %s6, %s4
  // Predicated region
  $region2: #{bert_for_pretraining.23} parent=0 // pred_check
    _
  $region3: #{bert_for_pretraining.23} parent=0 // pred_check_branch
    %9 = sbr.rel (0) target = $region5
  $region4: #{bert_for_pretraining.23} parent=0 // pred_region
    _
  $region5: #{bert_for_pretraining.23} parent=0 // pred_fallthru
    _
  // Predicated region
  $region6: #{bert_for_pretraining.23} parent=0 // pred_check
    _
  $region7: #{bert_for_pretraining.23} parent=0 // pred_check_branch
    %11 = sbr.rel (0) target = $region9
  $region8: #{bert_for_pretraining.23} parent=0 // pred_region
    _
  $region9: #{bert_for_pretraining.23} parent=0 // pred_fallthru
    _
  // Predicated region
  $region10: #{bert_for_pretraining.23} parent=0 // pred_check
    _
  $region11: #{bert_for_pretraining.23} parent=0 // pred_check_branch
    %13 = sbr.rel (0) target = $region13
  $region12: #{bert_for_pretraining.23} parent=0 // pred_region
    _
  $region13: #{bert_for_pretraining.23} parent=0 // pred_fallthru
    _
  %p14 = scmp.eq.s32.totalorder 0, 0
  // Predicated region
  $region14: #{bert_for_pretraining.23} parent=0 // pred_check
    %p15 = pneg %p14
  $region15: #{bert_for_pretraining.23} parent=0 // pred_check_branch
    %17 = sbr.rel (%p15) target = $region17
  $region16: #{bert_for_pretraining.23} parent=0 // pred_region
    %18 = vst [vmem:[#allocation2] sm:$0xff] 0.0
    %19 = vst [vmem:[#allocation2 + $0x8] sm:$0xff] 0.0
  $region17: #{bert_for_pretraining.23} parent=0 // pred_fallthru
    _
  %v20 = vld [vmem:[#allocation2] sm:$0xff]
  %v21 = vld [vmem:[#allocation2 + $0x8] sm:$0xff]
  %v22 = vld [vmem:[%s0] sm:$0xf]
  %v23 = vld [vmem:[%s0 + $0x4] sm:$0xf]
  %v24 = vld [vmem:[%s1] sm:$0xf]
  %v25 = vld [vmem:[%s1 + $0x4] sm:$0xf]
  %v26 = vld [vmem:[%s1 + $0x8] sm:$0xf]
  %v27 = vld [vmem:[%s1 + $0xc] sm:$0xf]
  %v28 = vld [vmem:[%s1 + $0x10] sm:$0xf]
  %v29 = vld [vmem:[%s1 + $0x14] sm:$0xf]
  %v30 = vld [vmem:[%s1 + $0x18] sm:$0xf]
  %v31 = vld [vmem:[%s1 + $0x1c] sm:$0xf]
  %v32 = vld [vmem:[%s1 + $0x20] sm:$0xf]
  %v33 = vld [vmem:[%s1 + $0x24] sm:$0xf]
  %v34 = vld [vmem:[%s1 + $0x28] sm:$0xf]
  %v35 = vld [vmem:[%s1 + $0x2c] sm:$0xf]
  %v36 = vld [vmem:[%s1 + $0x30] sm:$0xf]
  %v37 = vld [vmem:[%s1 + $0x34] sm:$0xf]
  %v38 = vld [vmem:[%s1 + $0x38] sm:$0xf]
  %v39 = vld [vmem:[%s1 + $0x3c] sm:$0xf]
  %v42 = vunpack.c.l.b16 %v22
  %v43 = vunpack.c.l.b16 %v23
  %v44 = vpack.c.b16 %v43, %v42
  %v62 = vunpack.c.l.b16 %v24
  %v63 = vunpack.c.l.b16 %v25
  %v64 = vunpack.c.l.b16 %v26
  %v65 = vunpack.c.l.b16 %v27
  %v66 = vunpack.c.l.b16 %v28
  %v67 = vunpack.c.l.b16 %v29
  %v68 = vunpack.c.l.b16 %v30
  %v69 = vunpack.c.l.b16 %v31
  %v70 = vunpack.c.l.b16 %v32
  %v71 = vunpack.c.l.b16 %v33
  %v72 = vunpack.c.l.b16 %v34
  %v73 = vunpack.c.l.b16 %v35
  %v74 = vunpack.c.l.b16 %v36
  %v75 = vunpack.c.l.b16 %v37
  %v76 = vunpack.c.l.b16 %v38
  %v77 = vunpack.c.l.b16 %v39
  %v78 = vpack.c.b16 %v63, %v62
  %v79 = vpack.c.b16 %v65, %v64
  %v80 = vpack.c.b16 %v67, %v66
  %v81 = vpack.c.b16 %v69, %v68
  %v82 = vpack.c.b16 %v71, %v70
  %v83 = vpack.c.b16 %v73, %v72
  %v84 = vpack.c.b16 %v75, %v74
  %v85 = vpack.c.b16 %v77, %v76
  %94 = vmatpush.bf16.msra.mxu0 %v85
  %95 = vmatpush.bf16.msra.mxu0 %v84
  %96 = vmatpush.bf16.msra.mxu0 %v83
  %97 = vmatpush.bf16.msra.mxu0 %v82
  %98 = vmatpush.bf16.msra.mxu0 %v81
  %99 = vmatpush.bf16.msra.mxu0 %v80
  %100 = vmatpush.bf16.msra.mxu0 %v79
  %101 = vmatpush.bf16.msra.mxu0 %v78
  %102 = vmatmul.bf16.gmra.mxu0 %v44
  %v103 = vpop.f32.mrf.mxu0
  %v104 = vadd.f32 0.0, %v103
  %v105 = vpop.f32.mrf.mxu0
  %v106 = vadd.f32 0.0, %v105
  %107 = vdwg.mxu0
  %v108 = vadd.f32 %v20, %v104
  %v109 = vadd.f32 %v21, %v106
  %110 = vst [vmem:[#allocation2] sm:$0xff] %v108
  %111 = vst [vmem:[#allocation2 + $0x8] sm:$0xff] %v109
  // Predicated region
  $region18: #{bert_for_pretraining.23} parent=0 // pred_check
    %p112 = pneg %p14
  $region19: #{bert_for_pretraining.23} parent=0 // pred_check_branch
    %114 = sbr.rel (%p112) target = $region21
  $region20: #{bert_for_pretraining.23} parent=0 // pred_region
    %v115 = vld [vmem:[#allocation2] sm:$0xff]
    %v116 = vld [vmem:[#allocation2 + $0x8] sm:$0xff]
    %v117 = vld [vmem:[%s2] sm:$0x1]
    %v119 = vperm.slane %v117, 0
    %v121 = vadd.f32 %v115, %v119
    %v122 = vadd.f32 %v116, %v119
    %v123 = vpack.c.bf16 %v121, %v121
    %v124 = vpack.c.bf16 %v122, %v122
    %125 = vst [vmem:[%s3] sm:$0xf] %v123
    %126 = vst [vmem:[%s3 + $0x4] sm:$0xf] %v124
  $region21: #{bert_for_pretraining.23} parent=0 // pred_fallthru
    _
  // Predicated region
  $region22: #{bert_for_pretraining.23} parent=0 // pred_check
    _
  $region23: #{bert_for_pretraining.23} parent=0 // pred_check_branch
    %128 = sbr.rel (0) target = $region25
  $region24: #{bert_for_pretraining.23} parent=0 // pred_region
    _
  $region25: #{bert_for_pretraining.23} parent=0 // pred_fallthru
    _
  // Predicated region
  $region26: #{bert_for_pretraining.23} parent=0 // pred_check
    _
  $region27: #{bert_for_pretraining.23} parent=0 // pred_check_branch
    %130 = sbr.rel (0) target = $region29
  $region28: #{bert_for_pretraining.23} parent=0 // pred_region
    _
  $region29: #{bert_for_pretraining.23} parent=0 // pred_fallthru
    _

// kernel: bert_for_pretraining.22
$region0: #{bert_for_pretraining.22}
  #allocation0 [shape = 'u32[]', space=smem, size = 0x4, offset = 0x4, fixed_abs, tag = 'smem constant byte address 0x4 - core index']
  #allocation1 [shape = 'u32[72,128]{1,0:T(1,128)}', space=vmem, size = 0x9000, scoped, tag = 'internal scratch']
  %s0 = inlined_call_operand.vmem [shape: bf16[2,8,64], index: 0, kind: input, shape index: {}]
  %s1 = inlined_call_operand.vmem [shape: bf16[2,8,64], index: 1, kind: input, shape index: {}]
  %s2 = inlined_call_operand.vmem [shape: bf16[2,8,64], index: 2, kind: input, shape index: {}]
  %s3 = inlined_call_operand.vmem [shape: f32[2,1,8], index: 3, kind: input, shape index: {}]
  %s4 = inlined_call_operand.vmem [shape: bf16[2,8,64], index: 4, kind: output, shape index: {}]
  %s5 = sld [smem:[#allocation0]]
  $region49: #{bert_for_pretraining.22} parent=0
    _
  %s7 = ssub.s32 1, %s5
  %s8 = scalar_select 0, %s7, %s5
  loop: start=0, step=1, limit=4
  $region2: #{bert_for_pretraining.22} parent=0 // loop_pre_header
    _
  $region3: #{bert_for_pretraining.22} parent=0 // loop_header
    %s10 = sphi 0, %s14
    %p11 = scmp.ge.s32.totalorder %s10, 4
    %s20 = sphi 0, %s22
    %s23 = sphi 0, %s20
    %s24 = sphi 0, %s23
    %s40 = sphi 0, %s24
    %s46 = sphi 0, %s48
    %s49 = sphi 0, %s46
    %s50 = sphi 0, %s49
    %s66 = sphi 0, %s50
    %s72 = sphi 0, %s74
    %s75 = sphi 0, %s72
    %s76 = sphi 0, %s75
    %s92 = sphi 0, %s76
    %s98 = sphi 0, %s100
    %s101 = sphi 0, %s98
    %s102 = sphi 0, %s101
    %s118 = sphi 0, %s102
    %s124 = sphi 0, %s126
    %s127 = sphi 0, %s124
    %s128 = sphi 0, %s127
    %s144 = sphi 0, %s128
  $region4: #{bert_for_pretraining.22} parent=0 // loop_header_branch
    %13 = sbr.rel (%p11) target = $region8
  $region5: #{bert_for_pretraining.22} parent=0 // loop_body
    %s15 = ssub.s32 %s10, 1
    %s16 = ssub.s32 %s10, 2
    %s17 = sadd.s32 %s10, 1
    %s18 = ssub.s32 %s10, %s17
    %p19 = scmp.eq.s32.totalorder %s18, 0
    %s21 = sadd.s32 %s20, 1
    %s22 = scalar_select %p19, %s20, %s21
    %p25 = pneg %p19
    %p26 = scmp.eq.s32.totalorder %s10, 1
    %p27 = por %p25, %p26
    %p28 = scmp.ne.s32.totalorder %s20, %s23
    %p29 = scmp.eq.s32.totalorder %s10, 0
    %p30 = por %p28, %p29
    %p31 = scmp.ne.s32.totalorder %s20, %s23
    %p32 = scmp.eq.s32.totalorder %s15, 1
    %p33 = por %p31, %p32
    %p34 = scmp.ne.s32.totalorder %s23, %s24
    %p35 = scmp.eq.s32.totalorder %s15, 0
    %p36 = por %p34, %p35
    %p37 = scmp.ne.s32.totalorder %s23, %s24
    %p38 = scmp.eq.s32.totalorder %s16, 1
    %p39 = por %p37, %p38
    %p41 = scmp.ne.s32.totalorder %s24, %s40
    %p42 = scmp.eq.s32.totalorder %s16, 0
    %p43 = por %p41, %p42
    %s44 = ssub.s32 %s10, %s17
    %p45 = scmp.eq.s32.totalorder %s44, 0
    %s47 = sadd.s32 %s46, 1
    %s48 = scalar_select %p45, %s46, %s47
    %p51 = pneg %p45
    %p52 = scmp.eq.s32.totalorder %s10, 1
    %p53 = por %p51, %p52
    %p54 = scmp.ne.s32.totalorder %s46, %s49
    %p55 = scmp.eq.s32.totalorder %s10, 0
    %p56 = por %p54, %p55
    %p57 = scmp.ne.s32.totalorder %s46, %s49
    %p58 = scmp.eq.s32.totalorder %s15, 1
    %p59 = por %p57, %p58
    %p60 = scmp.ne.s32.totalorder %s49, %s50
    %p61 = scmp.eq.s32.totalorder %s15, 0
    %p62 = por %p60, %p61
    %p63 = scmp.ne.s32.totalorder %s49, %s50
    %p64 = scmp.eq.s32.totalorder %s16, 1
    %p65 = por %p63, %p64
    %p67 = scmp.ne.s32.totalorder %s50, %s66
    %p68 = scmp.eq.s32.totalorder %s16, 0
    %p69 = por %p67, %p68
    %s70 = ssub.s32 %s10, %s17
    %p71 = scmp.eq.s32.totalorder %s70, 0
    %s73 = sadd.s32 %s72, 1
    %s74 = scalar_select %p71, %s72, %s73
    %p77 = pneg %p71
    %p78 = scmp.eq.s32.totalorder %s10, 1
    %p79 = por %p77, %p78
    %p80 = scmp.ne.s32.totalorder %s72, %s75
    %p81 = scmp.eq.s32.totalorder %s10, 0
    %p82 = por %p80, %p81
    %p83 = scmp.ne.s32.totalorder %s72, %s75
    %p84 = scmp.eq.s32.totalorder %s15, 1
    %p85 = por %p83, %p84
    %p86 = scmp.ne.s32.totalorder %s75, %s76
    %p87 = scmp.eq.s32.totalorder %s15, 0
    %p88 = por %p86, %p87
    %p89 = scmp.ne.s32.totalorder %s75, %s76
    %p90 = scmp.eq.s32.totalorder %s16, 1
    %p91 = por %p89, %p90
    %p93 = scmp.ne.s32.totalorder %s76, %s92
    %p94 = scmp.eq.s32.totalorder %s16, 0
    %p95 = por %p93, %p94
    %s96 = ssub.s32 %s10, %s17
    %p97 = scmp.eq.s32.totalorder %s96, 0
    %s99 = sadd.s32 %s98, 1
    %s100 = scalar_select %p97, %s98, %s99
    %p103 = pneg %p97
    %p104 = scmp.eq.s32.totalorder %s10, 1
    %p105 = por %p103, %p104
    %p106 = scmp.ne.s32.totalorder %s98, %s101
    %p107 = scmp.eq.s32.totalorder %s10, 0
    %p108 = por %p106, %p107
    %p109 = scmp.ne.s32.totalorder %s98, %s101
    %p110 = scmp.eq.s32.totalorder %s15, 1
    %p111 = por %p109, %p110
    %p112 = scmp.ne.s32.totalorder %s101, %s102
    %p113 = scmp.eq.s32.totalorder %s15, 0
    %p114 = por %p112, %p113
    %p115 = scmp.ne.s32.totalorder %s101, %s102
    %p116 = scmp.eq.s32.totalorder %s16, 1
    %p117 = por %p115, %p116
    %p119 = scmp.ne.s32.totalorder %s102, %s118
    %p120 = scmp.eq.s32.totalorder %s16, 0
    %p121 = por %p119, %p120
    %s122 = ssub.s32 %s10, %s17
    %p123 = scmp.eq.s32.totalorder %s122, 0
    %s125 = sadd.s32 %s124, 1
    %s126 = scalar_select %p123, %s124, %s125
    %p129 = pneg %p123
    %p130 = scmp.eq.s32.totalorder %s10, 1
    %p131 = por %p129, %p130
    %p132 = scmp.ne.s32.totalorder %s124, %s127
    %p133 = scmp.eq.s32.totalorder %s10, 0
    %p134 = por %p132, %p133
    %p135 = scmp.ne.s32.totalorder %s124, %s127
    %p136 = scmp.eq.s32.totalorder %s15, 1
    %p137 = por %p135, %p136
    %p138 = scmp.ne.s32.totalorder %s127, %s128
    %p139 = scmp.eq.s32.totalorder %s15, 0
    %p140 = por %p138, %p139
    %p141 = scmp.ne.s32.totalorder %s127, %s128
    %p142 = scmp.eq.s32.totalorder %s16, 1
    %p143 = por %p141, %p142
    %p145 = scmp.ne.s32.totalorder %s128, %s144
    %p146 = scmp.eq.s32.totalorder %s16, 0
    %p147 = por %p145, %p146
    %p148 = scmp.le.s32.totalorder 1, %s10
    %p149 = scmp.lt.s32.totalorder %s10, 3
    %p150 = pnand %p148, %p149
    %p151 = pneg %p150
    // Predicated region
    $region9: #{bert_for_pretraining.22} parent=5 // pred_check
      _
    $region10: #{bert_for_pretraining.22} parent=5 // pred_check_branch
      %153 = sbr.rel (%p150) target = $region12
    $region11: #{bert_for_pretraining.22} parent=5 // pred_region
      %s154 = ssub.s32 %s10, 1
    $region12: #{bert_for_pretraining.22} parent=5 // pred_fallthru
      _
    %p155 = scmp.lt.s32.totalorder %s10, 2
    // Predicated region
    $region13: #{bert_for_pretraining.22} parent=5 // pred_check
      %p156 = pneg %p155
    $region14: #{bert_for_pretraining.22} parent=5 // pred_check_branch
      %158 = sbr.rel (%p156) target = $region16
    $region15: #{bert_for_pretraining.22} parent=5 // pred_region
      // Predicated region
      $region17: #{bert_for_pretraining.22} parent=15 // pred_check
        %p159 = pneg %p30
      $region18: #{bert_for_pretraining.22} parent=15 // pred_check_branch
        %161 = sbr.rel (%p159) target = $region20
      $region19: #{bert_for_pretraining.22} parent=15 // pred_region
        %p162 = scmp.lt.s32.totalorder %s10, 1
        %s163 = scalar_select %p162, %s10, 1
        %s164 = smul.addr %s163, 4
        %s165 = scalar_lea.vmem %s0, %s164
      $region20: #{bert_for_pretraining.22} parent=15 // pred_fallthru
        _
      // Predicated region
      $region21: #{bert_for_pretraining.22} parent=15 // pred_check
        %p166 = pneg %p56
      $region22: #{bert_for_pretraining.22} parent=15 // pred_check_branch
        %168 = sbr.rel (%p166) target = $region24
      $region23: #{bert_for_pretraining.22} parent=15 // pred_region
        %p169 = scmp.lt.s32.totalorder %s10, 1
        %s170 = scalar_select %p169, %s10, 1
        %s171 = smul.addr %s170, 4
        %s172 = scalar_lea.vmem %s1, %s171
      $region24: #{bert_for_pretraining.22} parent=15 // pred_fallthru
        _
      // Predicated region
      $region25: #{bert_for_pretraining.22} parent=15 // pred_check
        %p173 = pneg %p82
      $region26: #{bert_for_pretraining.22} parent=15 // pred_check_branch
        %175 = sbr.rel (%p173) target = $region28
      $region27: #{bert_for_pretraining.22} parent=15 // pred_region
        %p176 = scmp.lt.s32.totalorder %s10, 1
        %s177 = scalar_select %p176, %s10, 1
        %s178 = smul.addr %s177, 4
        %s179 = scalar_lea.vmem %s2, %s178
      $region28: #{bert_for_pretraining.22} parent=15 // pred_fallthru
        _
      // Predicated region
      $region29: #{bert_for_pretraining.22} parent=15 // pred_check
        %p180 = pneg %p108
      $region30: #{bert_for_pretraining.22} parent=15 // pred_check_branch
        %182 = sbr.rel (%p180) target = $region32
      $region31: #{bert_for_pretraining.22} parent=15 // pred_region
        %p183 = scmp.lt.s32.totalorder %s10, 1
        %s184 = scalar_select %p183, %s10, 1
        %s185 = scalar_lea.vmem %s3, %s184
      $region32: #{bert_for_pretraining.22} parent=15 // pred_fallthru
        _
    $region16: #{bert_for_pretraining.22} parent=5 // pred_fallthru
      _
    %p186 = scmp.le.s32.totalorder 1, %s10
    %p187 = scmp.lt.s32.totalorder %s10, 3
    %p188 = pnand %p186, %p187
    %p189 = pneg %p188
    // Predicated region
    $region33: #{bert_for_pretraining.22} parent=5 // pred_check
      _
    $region34: #{bert_for_pretraining.22} parent=5 // pred_check_branch
      %191 = sbr.rel (%p188) target = $region36
    $region35: #{bert_for_pretraining.22} parent=5 // pred_region
      %s192 = ssub.s32 %s10, 1
      %p193 = scmp.lt.s32.totalorder %s15, 1
      %s194 = scalar_select %p193, %s15, 1
      %s195 = smul.addr %s194, 4
      %s196 = scalar_lea.vmem %s0, %s195
      %p197 = pneg %p36
      %p198 = pneg %p33
      %p199 = scmp.lt.s32.totalorder %s15, 1
      %s200 = scalar_select %p199, %s15, 1
      %s201 = smul.addr %s200, 4
      %s202 = scalar_lea.vmem %s1, %s201
      %p203 = pneg %p62
      %p204 = pneg %p59
      %p205 = scmp.lt.s32.totalorder %s15, 1
      %s206 = scalar_select %p205, %s15, 1
      %s207 = smul.addr %s206, 4
      %s208 = scalar_lea.vmem %s2, %s207
      %p209 = pneg %p88
      %p210 = pneg %p85
      %p211 = scmp.lt.s32.totalorder %s15, 1
      %s212 = scalar_select %p211, %s15, 1
      %s213 = scalar_lea.vmem %s3, %s212
      %p214 = pneg %p114
      %p215 = pneg %p111
      %p216 = pneg %p140
      %p217 = pneg %p137
      %p218 = scmp.lt.s32.totalorder %s15, 1
      %s219 = scalar_select %p218, %s15, 1
      %s220 = smul.addr %s219, 4
      %s221 = scalar_lea.vmem %s4, %s220
      %p222 = scmp.lt.s32.totalorder %s15, 1
      %s223 = scalar_select %p222, %s15, 1
      %s224 = smul.addr %s223, 4
      %s225 = scalar_lea.vmem %s0, %s224
      %p226 = scmp.lt.s32.totalorder %s15, 1
      %s227 = scalar_select %p226, %s15, 1
      %s228 = smul.addr %s227, 4
      %s229 = scalar_lea.vmem %s1, %s228
      %p230 = scmp.lt.s32.totalorder %s15, 1
      %s231 = scalar_select %p230, %s15, 1
      %s232 = smul.addr %s231, 4
      %s233 = scalar_lea.vmem %s2, %s232
      %p234 = scmp.lt.s32.totalorder %s15, 1
      %s235 = scalar_select %p234, %s15, 1
      %s236 = scalar_lea.vmem %s3, %s235
      %p237 = scmp.lt.s32.totalorder %s15, 1
      %s238 = scalar_select %p237, %s15, 1
      %s239 = smul.addr %s238, 4
      %s240 = scalar_lea.vmem %s4, %s239
      %v242 = vld [vmem:[%s225] sm:$0xf]
      %v243 = vld [vmem:[%s229] sm:$0xf]
      %v244 = vld [vmem:[%s233] sm:$0xf]
      %v245 = vld [vmem:[%s236] sm:$0x1]
      %vm246 = vcmask 130048
      %v248 = vsel %vm246, %v242, 0
      %v251 = vsel %vm246, %v243, 0
      %253 = vmatpush.bf16.xpose.msra.mxu0 0
      %254 = vmatpush.bf16.xpose.msra.mxu0 0
      %255 = vmatpush.bf16.xpose.msra.mxu0 0
      %256 = vmatpush.bf16.xpose.msra.mxu0 0
      %257 = vmatpush.bf16.xpose.msra.mxu0 0
      %258 = vmatpush.bf16.xpose.msra.mxu0 0
      %259 = vmatpush.bf16.xpose.msra.mxu0 0
      %260 = vmatpush.bf16.xpose.msra.mxu0 %v251
      %261 = vmatmul.bf16.gmra.mxu0 %v248
      %v262 = vpop.f32.mrf.mxu0
      %v263 = vadd.f32 0.0, %v262
      %v264 = vpop.f32.mrf.mxu0
      %265 = vdwg.mxu0
      %v266 = vmul.f32 %v263, 0.25
      %v268 = vperm.slane %v245, 0
      %v270 = vadd.f32 %v266, %v268
      %vm271 = vcmask 64512
      %v272 = vsel %vm271, %v270, -inf
      %273 = vmax.xlane.f32.xlu0 %v272
      %v274 = vpop.xlane.xlu0 %273
      %v275 = vsub.f32 %v270, %v274
      %v276 = vmul.f32 %v275, 1.442695
      %v277 = vpow.pop %v276
      %v278 = vsel %vm271, %v277, 0.0
      %279 = vadd.xlane.f32.xlu0 %v278
      %v280 = vpop.xlane.xlu0 %279
      %v281 = vrcp.pop %v280
      %v282 = vmul.f32 %v277, %v281
      %v283 = vpack.c.bf16 %v282, %v282
      %v285 = vsel %vm271, %v283, 0
      %vm287 = vcmask 1043456
      %v289 = vsel %vm287, %v244, 0
      %291 = vmatpush.bf16.msra.mxu0 0
      %292 = vmatpush.bf16.msra.mxu0 0
      %293 = vmatpush.bf16.msra.mxu0 0
      %294 = vmatpush.bf16.msra.mxu0 0
      %295 = vmatpush.bf16.msra.mxu0 0
      %296 = vmatpush.bf16.msra.mxu0 0
      %297 = vmatpush.bf16.msra.mxu0 0
      %298 = vmatpush.bf16.msra.mxu0 %v289
      %299 = vmatmul.bf16.gmra.mxu0 %v285
      %v300 = vpop.f32.mrf.mxu0
      %v301 = vadd.f32 0.0, %v300
      %v302 = vpop.f32.mrf.mxu0
      %303 = vdwg.mxu0
      %v305 = vunpack.c.l.b16 %v242
      %v306 = vpack.c.b16 %v305, %v305
      %307 = vrot.lane.b32.xlu0 %v306, 112
      %v308 = vpop.permute.xlu0 %307
      %v310 = vunpack.c.l.b16 %v243
      %v311 = vpack.c.b16 %v310, %v310
      %312 = vrot.lane.b32.xlu0 %v311, 112
      %v313 = vpop.permute.xlu0 %312
      %v315 = vsel %vm246, %v308, 0
      %v318 = vsel %vm246, %v313, 0
      %320 = vmatpush.bf16.xpose.msra.mxu0 0
      %321 = vmatpush.bf16.xpose.msra.mxu0 0
      %322 = vmatpush.bf16.xpose.msra.mxu0 0
      %323 = vmatpush.bf16.xpose.msra.mxu0 0
      %324 = vmatpush.bf16.xpose.msra.mxu0 0
      %325 = vmatpush.bf16.xpose.msra.mxu0 0
      %326 = vmatpush.bf16.xpose.msra.mxu0 0
      %327 = vmatpush.bf16.xpose.msra.mxu0 %v318
      %328 = vmatmul.bf16.gmra.mxu0 %v315
      %v329 = vpop.f32.mrf.mxu0
      %v330 = vadd.f32 0.0, %v329
      %v331 = vpop.f32.mrf.mxu0
      %332 = vdwg.mxu0
      %v333 = vmul.f32 %v330, 0.25
      %v334 = vadd.f32 %v333, %v268
      %v335 = vsel %vm271, %v334, -inf
      %336 = vmax.xlane.f32.xlu0 %v335
      %v337 = vpop.xlane.xlu0 %336
      %v338 = vsub.f32 %v334, %v337
      %v339 = vmul.f32 %v338, 1.442695
      %v340 = vpow.pop %v339
      %v341 = vsel %vm271, %v340, 0.0
      %342 = vadd.xlane.f32.xlu0 %v341
      %v343 = vpop.xlane.xlu0 %342
      %v344 = vrcp.pop %v343
      %v345 = vmul.f32 %v340, %v344
      %v346 = vpack.c.bf16 %v345, %v345
      %v348 = vunpack.c.l.b16 %v244
      %v349 = vpack.c.b16 %v348, %v348
      %350 = vrot.lane.b32.xlu0 %v349, 112
      %v351 = vpop.permute.xlu0 %350
      %v353 = vsel %vm271, %v346, 0
      %v356 = vsel %vm287, %v351, 0
      %358 = vmatpush.bf16.msra.mxu0 0
      %359 = vmatpush.bf16.msra.mxu0 0
      %360 = vmatpush.bf16.msra.mxu0 0
      %361 = vmatpush.bf16.msra.mxu0 0
      %362 = vmatpush.bf16.msra.mxu0 0
      %363 = vmatpush.bf16.msra.mxu0 0
      %364 = vmatpush.bf16.msra.mxu0 0
      %365 = vmatpush.bf16.msra.mxu0 %v356
      %366 = vmatmul.bf16.gmra.mxu0 %v353
      %v367 = vpop.f32.mrf.mxu0
      %v368 = vadd.f32 0.0, %v367
      %v369 = vpop.f32.mrf.mxu0
      %370 = vdwg.mxu0
      %371 = vrot.lane.b32.xlu0 %v306, 96
      %v372 = vpop.permute.xlu0 %371
      %373 = vrot.lane.b32.xlu0 %v311, 96
      %v374 = vpop.permute.xlu0 %373
      %v376 = vsel %vm246, %v372, 0
      %v379 = vsel %vm246, %v374, 0
      %381 = vmatpush.bf16.xpose.msra.mxu0 0
      %382 = vmatpush.bf16.xpose.msra.mxu0 0
      %383 = vmatpush.bf16.xpose.msra.mxu0 0
      %384 = vmatpush.bf16.xpose.msra.mxu0 0
      %385 = vmatpush.bf16.xpose.msra.mxu0 0
      %386 = vmatpush.bf16.xpose.msra.mxu0 0
      %387 = vmatpush.bf16.xpose.msra.mxu0 0
      %388 = vmatpush.bf16.xpose.msra.mxu0 %v379
      %389 = vmatmul.bf16.gmra.mxu0 %v376
      %v390 = vpop.f32.mrf.mxu0
      %v391 = vadd.f32 0.0, %v390
      %v392 = vpop.f32.mrf.mxu0
      %393 = vdwg.mxu0
      %v394 = vmul.f32 %v391, 0.25
      %v395 = vadd.f32 %v394, %v268
      %v396 = vsel %vm271, %v395, -inf
      %397 = vmax.xlane.f32.xlu0 %v396
      %v398 = vpop.xlane.xlu0 %397
      %v399 = vsub.f32 %v395, %v398
      %v400 = vmul.f32 %v399, 1.442695
      %v401 = vpow.pop %v400
      %v402 = vsel %vm271, %v401, 0.0
      %403 = vadd.xlane.f32.xlu0 %v402
      %v404 = vpop.xlane.xlu0 %403
      %v405 = vrcp.pop %v404
      %v406 = vmul.f32 %v401, %v405
      %v407 = vpack.c.bf16 %v406, %v406
      %408 = vrot.lane.b32.xlu0 %v349, 96
      %v409 = vpop.permute.xlu0 %408
      %v411 = vsel %vm271, %v407, 0
      %v414 = vsel %vm287, %v409, 0
      %416 = vmatpush.bf16.msra.mxu0 0
      %417 = vmatpush.bf16.msra.mxu0 0
      %418 = vmatpush.bf16.msra.mxu0 0
      %419 = vmatpush.bf16.msra.mxu0 0
      %420 = vmatpush.bf16.msra.mxu0 0
      %421 = vmatpush.bf16.msra.mxu0 0
      %422 = vmatpush.bf16.msra.mxu0 0
      %423 = vmatpush.bf16.msra.mxu0 %v414
      %424 = vmatmul.bf16.gmra.mxu0 %v411
      %v425 = vpop.f32.mrf.mxu0
      %v426 = vadd.f32 0.0, %v425
      %v427 = vpop.f32.mrf.mxu0
      %428 = vdwg.mxu0
      %429 = vrot.lane.b32.xlu0 %v306, 80
      %v430 = vpop.permute.xlu0 %429
      %431 = vrot.lane.b32.xlu0 %v311, 80
      %v432 = vpop.permute.xlu0 %431
      %v434 = vsel %vm246, %v430, 0
      %v437 = vsel %vm246, %v432, 0
      %439 = vmatpush.bf16.xpose.msra.mxu0 0
      %440 = vmatpush.bf16.xpose.msra.mxu0 0
      %441 = vmatpush.bf16.xpose.msra.mxu0 0
      %442 = vmatpush.bf16.xpose.msra.mxu0 0
      %443 = vmatpush.bf16.xpose.msra.mxu0 0
      %444 = vmatpush.bf16.xpose.msra.mxu0 0
      %445 = vmatpush.bf16.xpose.msra.mxu0 0
      %446 = vmatpush.bf16.xpose.msra.mxu0 %v437
      %447 = vmatmul.bf16.gmra.mxu0 %v434
      %v448 = vpop.f32.mrf.mxu0
      %v449 = vadd.f32 0.0, %v448
      %v450 = vpop.f32.mrf.mxu0
      %451 = vdwg.mxu0
      %v452 = vmul.f32 %v449, 0.25
      %v453 = vadd.f32 %v452, %v268
      %v454 = vsel %vm271, %v453, -inf
      %455 = vmax.xlane.f32.xlu0 %v454
      %v456 = vpop.xlane.xlu0 %455
      %v457 = vsub.f32 %v453, %v456
      %v458 = vmul.f32 %v457, 1.442695
      %v459 = vpow.pop %v458
      %v460 = vsel %vm271, %v459, 0.0
      %461 = vadd.xlane.f32.xlu0 %v460
      %v462 = vpop.xlane.xlu0 %461
      %v463 = vrcp.pop %v462
      %v464 = vmul.f32 %v459, %v463
      %v465 = vpack.c.bf16 %v464, %v464
      %466 = vrot.lane.b32.xlu0 %v349, 80
      %v467 = vpop.permute.xlu0 %466
      %v469 = vsel %vm271, %v465, 0
      %v472 = vsel %vm287, %v467, 0
      %474 = vmatpush.bf16.msra.mxu0 0
      %475 = vmatpush.bf16.msra.mxu0 0
      %476 = vmatpush.bf16.msra.mxu0 0
      %477 = vmatpush.bf16.msra.mxu0 0
      %478 = vmatpush.bf16.msra.mxu0 0
      %479 = vmatpush.bf16.msra.mxu0 0
      %480 = vmatpush.bf16.msra.mxu0 0
      %481 = vmatpush.bf16.msra.mxu0 %v472
      %482 = vmatmul.bf16.gmra.mxu0 %v469
      %v483 = vpop.f32.mrf.mxu0
      %v484 = vadd.f32 0.0, %v483
      %v485 = vpop.f32.mrf.mxu0
      %486 = vdwg.mxu0
      %488 = vrot.lane.b32.xlu0 %v368, 16
      %v489 = vpop.permute.xlu0 %488
      %492 = vrot.lane.b32.xlu0 %v426, 32
      %v493 = vpop.permute.xlu0 %492
      %496 = vrot.lane.b32.xlu0 %v484, 48
      %v497 = vpop.permute.xlu0 %496
      %v499 = vsel %vm246, %v301, %v489
      %vm500 = vcmask 261120
      %v501 = vsel %vm500, %v499, %v493
      %vm502 = vcmask 392192
      %v503 = vsel %vm502, %v501, %v497
      %v504 = vpack.c.bf16 %v503, %v503
      %vm505 = vcmask 519168
      %506 = vst.msk [vmem:[%s240] sm:$0xf] %vm505, %v504
      %p507 = scmp.lt.s32.totalorder %s15, 1
      %s508 = scalar_select %p507, %s15, 1
      %s509 = smul.addr %s508, 4
      %s510 = scalar_lea.vmem %s4, %s509
      // Predicated region
      $region37: #{bert_for_pretraining.22} parent=35 // pred_check
        %p511 = pneg %p137
      $region38: #{bert_for_pretraining.22} parent=35 // pred_check_branch
        %513 = sbr.rel (%p511) target = $region40
      $region39: #{bert_for_pretraining.22} parent=35 // pred_region
        _
      $region40: #{bert_for_pretraining.22} parent=35 // pred_fallthru
        _
    $region36: #{bert_for_pretraining.22} parent=5 // pred_fallthru
      _
    %p514 = scmp.le.s32.totalorder 2, %s10
    // Predicated region
    $region41: #{bert_for_pretraining.22} parent=5 // pred_check
      %p515 = pneg %p514
    $region42: #{bert_for_pretraining.22} parent=5 // pred_check_branch
      %517 = sbr.rel (%p515) target = $region44
    $region43: #{bert_for_pretraining.22} parent=5 // pred_region
      %s518 = ssub.s32 %s10, 2
      // Predicated region
      $region45: #{bert_for_pretraining.22} parent=43 // pred_check
        %p519 = pneg %p143
      $region46: #{bert_for_pretraining.22} parent=43 // pred_check_branch
        %521 = sbr.rel (%p519) target = $region48
      $region47: #{bert_for_pretraining.22} parent=43 // pred_region
        %p522 = scmp.lt.s32.totalorder %s16, 1
        %s523 = scalar_select %p522, %s16, 1
        %s524 = smul.addr %s523, 4
        %s525 = scalar_lea.vmem %s4, %s524
      $region48: #{bert_for_pretraining.22} parent=43 // pred_fallthru
        _
    $region44: #{bert_for_pretraining.22} parent=5 // pred_fallthru
      _
  $region6: #{bert_for_pretraining.22} parent=0 // loop_footer
    %s14 = sadd.s32 1, %s10
  $region7: #{bert_for_pretraining.22} parent=0 // loop_footer_branch
    %9 = sbr.rel target = $region3
  $region8: #{bert_for_pretraining.22} parent=0 // loop_exit
    _

// kernel: bert_for_pretraining.24
$region0: #{bert_for_pretraining.24}
  #allocation0 [shape = 'u32[]', space=smem, size = 0x4, offset = 0x4, fixed_abs, tag = 'smem constant byte address 0x4 - core index']
  #allocation1 [shape = 'u32[72,128]{1,0:T(1,128)}', space=vmem, size = 0x9000, scoped, tag = 'internal scratch']
  %s0 = inlined_call_operand.vmem [shape: bf16[16,64], index: 0, kind: input, shape index: {}]
  %s1 = inlined_call_operand.vmem [shape: bf16[16,64], index: 1, kind: input, shape index: {}]
  %s2 = inlined_call_operand.vmem [shape: f32[1,64], index: 2, kind: input, shape index: {}]
  %s3 = inlined_call_operand.vmem [shape: f32[1,64], index: 3, kind: input, shape index: {}]
  %s4 = inlined_call_operand.vmem [shape: bf16[16,64], index: 4, kind: output, shape index: {}]
  %s5 = sld [smem:[#allocation0]]
  $region26: #{bert_for_pretraining.24} parent=0
    _
  %s7 = ssub.s32 1, %s5
  %s8 = scalar_select 0, %s7, %s5
  // Predicated region
  $region2: #{bert_for_pretraining.24} parent=0 // pred_check
    _
  $region3: #{bert_for_pretraining.24} parent=0 // pred_check_branch
    %10 = sbr.rel (0) target = $region5
  $region4: #{bert_for_pretraining.24} parent=0 // pred_region
    _
  $region5: #{bert_for_pretraining.24} parent=0 // pred_fallthru
    _
  // Predicated region
  $region6: #{bert_for_pretraining.24} parent=0 // pred_check
    _
  $region7: #{bert_for_pretraining.24} parent=0 // pred_check_branch
    %12 = sbr.rel (0) target = $region9
  $region8: #{bert_for_pretraining.24} parent=0 // pred_region
    _
  $region9: #{bert_for_pretraining.24} parent=0 // pred_fallthru
    _
  // Predicated region
  $region10: #{bert_for_pretraining.24} parent=0 // pred_check
    _
  $region11: #{bert_for_pretraining.24} parent=0 // pred_check_branch
    %14 = sbr.rel (0) target = $region13
  $region12: #{bert_for_pretraining.24} parent=0 // pred_region
    _
  $region13: #{bert_for_pretraining.24} parent=0 // pred_fallthru
    _
  // Predicated region
  $region14: #{bert_for_pretraining.24} parent=0 // pred_check
    _
  $region15: #{bert_for_pretraining.24} parent=0 // pred_check_branch
    %16 = sbr.rel (0) target = $region17
  $region16: #{bert_for_pretraining.24} parent=0 // pred_region
    _
  $region17: #{bert_for_pretraining.24} parent=0 // pred_fallthru
    _
  %v17 = vld [vmem:[%s0] sm:$0xf]
  %v18 = vld [vmem:[%s0 + $0x4] sm:$0xf]
  %v19 = vunpack.c.l.bf16 %v17
  %v20 = vunpack.c.l.bf16 %v18
  %v21 = vld [vmem:[%s1] sm:$0xf]
  %v22 = vld [vmem:[%s1 + $0x4] sm:$0xf]
  %v23 = vunpack.c.l.bf16 %v21
  %v24 = vunpack.c.l.bf16 %v22
  %v25 = vadd.f32 %v19, %v23
  %v26 = vadd.f32 %v20, %v24
  %vm27 = vcmask 523264
  %v28 = vsel %vm27, %v25, 0.0
  %29 = vadd.xlane.f32.xlu0 %v28
  %v30 = vpop.xlane.xlu0 %29
  %v31 = vsel %vm27, %v26, 0.0
  %32 = vadd.xlane.f32.xlu0 %v31
  %v33 = vpop.xlane.xlu0 %32
  %v34 = vrcp.pop 64.0
  %v35 = vmul.f32 64.0, %v34
  %v36 = vsub.f32 1.0, %v35
  %v37 = vmul.f32 %v34, %v36
  %v38 = vadd.f32 %v34, %v37
  %vm39 = vweird.f32 %v34
  %v40 = vsel %vm39, %v34, %v38
  %v41 = vmul.f32 %v30, %v40
  %v42 = vmul.f32 %v33, %v40
  %v43 = vsub.f32 %v25, %v41
  %v44 = vsub.f32 %v26, %v42
  %v45 = vmul.f32 %v43, %v43
  %v46 = vmul.f32 %v44, %v44
  %v47 = vsel %vm27, %v45, 0.0
  %48 = vadd.xlane.f32.xlu0 %v47
  %v49 = vpop.xlane.xlu0 %48
  %v50 = vsel %vm27, %v46, 0.0
  %51 = vadd.xlane.f32.xlu0 %v50
  %v52 = vpop.xlane.xlu0 %51
  %v53 = vmul.f32 %v49, %v40
  %v54 = vmul.f32 %v52, %v40
  %v55 = vadd.f32 %v53, 1e-12
  %v56 = vadd.f32 %v54, 1e-12
  %v57 = vrsqrt.pop %v55
  %v58 = vmul.f32 %v57, %v55
  %v59 = vmul.f32 %v58, %v57
  %v60 = vmul.f32 0.5, %v59
  %v61 = vsub.f32 1.5, %v60
  %v62 = vmul.f32 %v57, %v61
  %vm63 = vweird.f32 %v55
  %vm64 = vweird.f32 %v57
  %vm65 = vmor %vm63, %vm64
  %v66 = vsel %vm65, %v57, %v62
  %v67 = vrsqrt.pop %v56
  %v68 = vmul.f32 %v67, %v56
  %v69 = vmul.f32 %v68, %v67
  %v70 = vmul.f32 0.5, %v69
  %v71 = vsub.f32 1.5, %v70
  %v72 = vmul.f32 %v67, %v71
  %vm73 = vweird.f32 %v56
  %vm74 = vweird.f32 %v67
  %vm75 = vmor %vm73, %vm74
  %v76 = vsel %vm75, %v67, %v72
  %v77 = vmul.f32 %v43, %v66
  %v78 = vmul.f32 %v44, %v76
  %v79 = vld [vmem:[%s2] sm:$0x1]
  %v81 = vperm.slane %v79, 0
  %v83 = vmul.f32 %v77, %v81
  %v84 = vmul.f32 %v78, %v81
  %v85 = vld [vmem:[%s3] sm:$0x1]
  %v87 = vperm.slane %v85, 0
  %v89 = vadd.f32 %v83, %v87
  %v90 = vadd.f32 %v84, %v87
  %v91 = vpack.c.bf16 %v89, %v89
  %v92 = vpack.c.bf16 %v90, %v90
  %vm93 = vcmask 519168
  %94 = vst.msk [vmem:[%s4] sm:$0xf] %vm93, %v91
  %95 = vst.msk [vmem:[%s4 + $0x4] sm:$0xf] %vm93, %v92
  // Predicated region
  $region18: #{bert_for_pretraining.24} parent=0 // pred_check
    _
  $region19: #{bert_for_pretraining.24} parent=0 // pred_check_branch
    %97 = sbr.rel (0) target = $region21
  $region20: #{bert_for_pretraining.24} parent=0 // pred_region
    _
  $region21: #{bert_for_pretraining.24} parent=0 // pred_fallthru
    _
  // Predicated region
  $region22: #{bert_for_pretraining.24} parent=0 // pred_check
    _
  $region23: #{bert_for_pretraining.24} parent=0 // pred_check_branch
    %99 = sbr.rel (0) target = $region25
  $region24: #{bert_for_pretraining.24} parent=0 // pred_region
    _
  $region25: #{bert_for_pretraining.24} parent=0 // pred_fallthru
    _

// kernel: bert_for_pretraining.25
$region0: #{bert_for_pretraining.25}
  #allocation0 [shape = 'u32[]', space=smem, size = 0x4, offset = 0x4, fixed_abs, tag = 'smem constant byte address 0x4 - core index']
  #allocation1 [shape = 'u32[72,128]{1,0:T(1,128)}', space=vmem, size = 0x9000, scoped, tag = 'internal scratch']
  #allocation2 [shape = 'f32[16,128]{1,0:T(8,128)}', space=vmem, size = 0x2000, scoped, tag = 'scratch operand']
  %s0 = inlined_call_operand.vmem [shape: bf16[16,128], index: 0, kind: input, shape index: {}]
  %s1 = inlined_call_operand.vmem [shape: bf16[128,128], index: 1, kind: input, shape index: {}]
  %s2 = inlined_call_operand.vmem [shape: f32[1,128], index: 2, kind: input, shape index: {}]
  %s3 = inlined_call_operand.vmem [shape: bf16[16,128], index: 3, kind: output, shape index: {}]
  %s4 = sld [smem:[#allocation0]]
  $region30: #{bert_for_pretraining.25} parent=0
    _
  %s6 = ssub.s32 1, %s4
  %s7 = scalar_select 0, %s6, %s4
  // Predicated region
  $region2: #{bert_for_pretraining.25} parent=0 // pred_check
    _
  $region3: #{bert_for_pretraining.25} parent=0 // pred_check_branch
    %9 = sbr.rel (0) target = $region5
  $region4: #{bert_for_pretraining.25} parent=0 // pred_region
    _
  $region5: #{bert_for_pretraining.25} parent=0 // pred_fallthru
    _
  // Predicated region
  $region6: #{bert_for_pretraining.25} parent=0 // pred_check
    _
  $region7: #{bert_for_pretraining.25} parent=0 // pred_check_branch
    %11 = sbr.rel (0) target = $region9
  $region8: #{bert_for_pretraining.25} parent=0 // pred_region
    _
  $region9: #{bert_for_pretraining.25} parent=0 // pred_fallthru
    _
  // Predicated region
  $region10: #{bert_for_pretraining.25} parent=0 // pred_check
    _
  $region11: #{bert_for_pretraining.25} parent=0 // pred_check_branch
    %13 = sbr.rel (0) target = $region13
  $region12: #{bert_for_pretraining.25} parent=0 // pred_region
    _
  $region13: #{bert_for_pretraining.25} parent=0 // pred_fallthru
    _
  %p14 = scmp.eq.s32.totalorder 0, 0
  // Predicated region
  $region14: #{bert_for_pretraining.25} parent=0 // pred_check
    %p15 = pneg %p14
  $region15: #{bert_for_pretraining.25} parent=0 // pred_check_branch
    %17 = sbr.rel (%p15) target = $region17
  $region16: #{bert_for_pretraining.25} parent=0 // pred_region
    %18 = vst [vmem:[#allocation2] sm:$0xff] 0.0
    %19 = vst [vmem:[#allocation2 + $0x8] sm:$0xff] 0.0
  $region17: #{bert_for_pretraining.25} parent=0 // pred_fallthru
    _
  %v20 = vld [vmem:[#allocation2] sm:$0xff]
  %v21 = vld [vmem:[#allocation2 + $0x8] sm:$0xff]
  %v22 = vld [vmem:[%s0] sm:$0xf]
  %v23 = vld [vmem:[%s0 + $0x4] sm:$0xf]
  %v24 = vld [vmem:[%s1] sm:$0xf]
  %v25 = vld [vmem:[%s1 + $0x4] sm:$0xf]
  %v26 = vld [vmem:[%s1 + $0x8] sm:$0xf]
  %v27 = vld [vmem:[%s1 + $0xc] sm:$0xf]
  %v28 = vld [vmem:[%s1 + $0x10] sm:$0xf]
  %v29 = vld [vmem:[%s1 + $0x14] sm:$0xf]
  %v30 = vld [vmem:[%s1 + $0x18] sm:$0xf]
  %v31 = vld [vmem:[%s1 + $0x1c] sm:$0xf]
  %v32 = vld [vmem:[%s1 + $0x20] sm:$0xf]
  %v33 = vld [vmem:[%s1 + $0x24] sm:$0xf]
  %v34 = vld [vmem:[%s1 + $0x28] sm:$0xf]
  %v35 = vld [vmem:[%s1 + $0x2c] sm:$0xf]
  %v36 = vld [vmem:[%s1 + $0x30] sm:$0xf]
  %v37 = vld [vmem:[%s1 + $0x34] sm:$0xf]
  %v38 = vld [vmem:[%s1 + $0x38] sm:$0xf]
  %v39 = vld [vmem:[%s1 + $0x3c] sm:$0xf]
  %v42 = vunpack.c.l.b16 %v22
  %v43 = vunpack.c.l.b16 %v23
  %v44 = vpack.c.b16 %v43, %v42
  %v62 = vunpack.c.l.b16 %v24
  %v63 = vunpack.c.l.b16 %v25
  %v64 = vunpack.c.l.b16 %v26
  %v65 = vunpack.c.l.b16 %v27
  %v66 = vunpack.c.l.b16 %v28
  %v67 = vunpack.c.l.b16 %v29
  %v68 = vunpack.c.l.b16 %v30
  %v69 = vunpack.c.l.b16 %v31
  %v70 = vunpack.c.l.b16 %v32
  %v71 = vunpack.c.l.b16 %v33
  %v72 = vunpack.c.l.b16 %v34
  %v73 = vunpack.c.l.b16 %v35
  %v74 = vunpack.c.l.b16 %v36
  %v75 = vunpack.c.l.b16 %v37
  %v76 = vunpack.c.l.b16 %v38
  %v77 = vunpack.c.l.b16 %v39
  %v78 = vpack.c.b16 %v63, %v62
  %v79 = vpack.c.b16 %v65, %v64
  %v80 = vpack.c.b16 %v67, %v66
  %v81 = vpack.c.b16 %v69, %v68
  %v82 = vpack.c.b16 %v71, %v70
  %v83 = vpack.c.b16 %v73, %v72
  %v84 = vpack.c.b16 %v75, %v74
  %v85 = vpack.c.b16 %v77, %v76
  %94 = vmatpush.bf16.msra.mxu0 %v85
  %95 = vmatpush.bf16.msra.mxu0 %v84
  %96 = vmatpush.bf16.msra.mxu0 %v83
  %97 = vmatpush.bf16.msra.mxu0 %v82
  %98 = vmatpush.bf16.msra.mxu0 %v81
  %99 = vmatpush.bf16.msra.mxu0 %v80
  %100 = vmatpush.bf16.msra.mxu0 %v79
  %101 = vmatpush.bf16.msra.mxu0 %v78
  %102 = vmatmul.bf16.gmra.mxu0 %v44
  %v103 = vpop.f32.mrf.mxu0
  %v104 = vadd.f32 0.0, %v103
  %v105 = vpop.f32.mrf.mxu0
  %v106 = vadd.f32 0.0, %v105
  %107 = vdwg.mxu0
  %v108 = vadd.f32 %v20, %v104
  %v109 = vadd.f32 %v21, %v106
  %110 = vst [vmem:[#allocation2] sm:$0xff] %v108
  %111 = vst [vmem:[#allocation2 + $0x8] sm:$0xff] %v109
  // Predicated region
  $region18: #{bert_for_pretraining.25} parent=0 // pred_check
    %p112 = pneg %p14
  $region19: #{bert_for_pretraining.25} parent=0 // pred_check_branch
    %114 = sbr.rel (%p112) target = $region21
  $region20: #{bert_for_pretraining.25} parent=0 // pred_region
    %v115 = vld [vmem:[#allocation2] sm:$0xff]
    %v116 = vld [vmem:[#allocation2 + $0x8] sm:$0xff]
    %v117 = vld [vmem:[%s2] sm:$0x1]
    %v119 = vperm.slane %v117, 0
    %v121 = vadd.f32 %v115, %v119
    %v122 = vadd.f32 %v116, %v119
    %v123 = vmul.f32 %v121, 0.5
    %v124 = vmul.f32 %v122, 0.5
    %v125 = vmul.f32 %v121, 0.044715
    %v126 = vmul.f32 %v122, 0.044715
    %v127 = vmul.f32 %v125, %v121
    %v128 = vmul.f32 %v126, %v122
    %v129 = vmul.f32 %v127, %v121
    %v130 = vmul.f32 %v128, %v122
    %v131 = vadd.f32 %v121, %v129
    %v132 = vadd.f32 %v122, %v130
    %v133 = vmul.f32 %v131, 0.7978846
    %v134 = vmul.f32 %v132, 0.7978846
    %v135 = vtanh.pop %v133
    %v136 = vtanh.pop %v134
    %v137 = vadd.f32 %v135, 1.0
    %v138 = vadd.f32 %v136, 1.0
    %v139 = vmul.f32 %v123, %v137
    %v140 = vmul.f32 %v124, %v138
    %v141 = vpack.c.bf16 %v139, %v139
    %v142 = vpack.c.bf16 %v140, %v140
    %143 = vst [vmem:[%s3] sm:$0xf] %v141
    %144 = vst [vmem:[%s3 + $0x4] sm:$0xf] %v142
  $region21: #{bert_for_pretraining.25} parent=0 // pred_fallthru
    _
  // Predicated region
  $region22: #{bert_for_pretraining.25} parent=0 // pred_check
    _
  $region23: #{bert_for_pretraining.25} parent=0 // pred_check_branch
    %146 = sbr.rel (0) target = $region25
  $region24: #{bert_for_pretraining.25} parent=0 // pred_region
    _
  $region25: #{bert_for_pretraining.25} parent=0 // pred_fallthru
    _
  // Predicated region
  $region26: #{bert_for_pretraining.25} parent=0 // pred_check
    _
  $region27: #{bert_for_pretraining.25} parent=0 // pred_check_branch
    %148 = sbr.rel (0) target = $region29
  $region28: #{bert_for_pretraining.25} parent=0 // pred_region
    _
  $region29: #{bert_for_pretraining.25} parent=0 // pred_fallthru
    _

// kernel: bert_for_pretraining.35
$region0: #{bert_for_pretraining.35}
  #allocation0 [shape = 'u32[]', space=smem, size = 0x4, offset = 0x4, fixed_abs, tag = 'smem constant byte address 0x4 - core index']
  #allocation1 [shape = 'u32[72,128]{1,0:T(1,128)}', space=vmem, size = 0x9000, scoped, tag = 'internal scratch']
  #allocation2 [shape = 'f32[8,128]{1,0:T(8,128)}', space=vmem, size = 0x1000, scoped, tag = 'scratch operand']
  %s0 = inlined_call_operand.vmem [shape: bf16[8,128], index: 0, kind: input, shape index: {}]
  %s1 = inlined_call_operand.vmem [shape: bf16[128,128], index: 1, kind: input, shape index: {}]
  %s2 = inlined_call_operand.vmem [shape: f32[1,128], index: 2, kind: input, shape index: {}]
  %s3 = inlined_call_operand.vmem [shape: f32[8,128], index: 3, kind: output, shape index: {}]
  %s4 = sld [smem:[#allocation0]]
  $region30: #{bert_for_pretraining.35} parent=0
    _
  %s6 = ssub.s32 1, %s4
  %s7 = scalar_select 0, %s6, %s4
  // Predicated region
  $region2: #{bert_for_pretraining.35} parent=0 // pred_check
    _
  $region3: #{bert_for_pretraining.35} parent=0 // pred_check_branch
    %9 = sbr.rel (0) target = $region5
  $region4: #{bert_for_pretraining.35} parent=0 // pred_region
    _
  $region5: #{bert_for_pretraining.35} parent=0 // pred_fallthru
    _
  // Predicated region
  $region6: #{bert_for_pretraining.35} parent=0 // pred_check
    _
  $region7: #{bert_for_pretraining.35} parent=0 // pred_check_branch
    %11 = sbr.rel (0) target = $region9
  $region8: #{bert_for_pretraining.35} parent=0 // pred_region
    _
  $region9: #{bert_for_pretraining.35} parent=0 // pred_fallthru
    _
  // Predicated region
  $region10: #{bert_for_pretraining.35} parent=0 // pred_check
    _
  $region11: #{bert_for_pretraining.35} parent=0 // pred_check_branch
    %13 = sbr.rel (0) target = $region13
  $region12: #{bert_for_pretraining.35} parent=0 // pred_region
    _
  $region13: #{bert_for_pretraining.35} parent=0 // pred_fallthru
    _
  %p14 = scmp.eq.s32.totalorder 0, 0
  // Predicated region
  $region14: #{bert_for_pretraining.35} parent=0 // pred_check
    %p15 = pneg %p14
  $region15: #{bert_for_pretraining.35} parent=0 // pred_check_branch
    %17 = sbr.rel (%p15) target = $region17
  $region16: #{bert_for_pretraining.35} parent=0 // pred_region
    %18 = vst [vmem:[#allocation2] sm:$0xff] 0.0
  $region17: #{bert_for_pretraining.35} parent=0 // pred_fallthru
    _
  %v19 = vld [vmem:[#allocation2] sm:$0xff]
  %v20 = vld [vmem:[%s0] sm:$0xf]
  %v21 = vld [vmem:[%s1] sm:$0xf]
  %v22 = vld [vmem:[%s1 + $0x4] sm:$0xf]
  %v23 = vld [vmem:[%s1 + $0x8] sm:$0xf]
  %v24 = vld [vmem:[%s1 + $0xc] sm:$0xf]
  %v25 = vld [vmem:[%s1 + $0x10] sm:$0xf]
  %v26 = vld [vmem:[%s1 + $0x14] sm:$0xf]
  %v27 = vld [vmem:[%s1 + $0x18] sm:$0xf]
  %v28 = vld [vmem:[%s1 + $0x1c] sm:$0xf]
  %v29 = vld [vmem:[%s1 + $0x20] sm:$0xf]
  %v30 = vld [vmem:[%s1 + $0x24] sm:$0xf]
  %v31 = vld [vmem:[%s1 + $0x28] sm:$0xf]
  %v32 = vld [vmem:[%s1 + $0x2c] sm:$0xf]
  %v33 = vld [vmem:[%s1 + $0x30] sm:$0xf]
  %v34 = vld [vmem:[%s1 + $0x34] sm:$0xf]
  %v35 = vld [vmem:[%s1 + $0x38] sm:$0xf]
  %v36 = vld [vmem:[%s1 + $0x3c] sm:$0xf]
  %v53 = vunpack.c.l.b16 %v21
  %v54 = vunpack.c.l.b16 %v22
  %v55 = vunpack.c.l.b16 %v23
  %v56 = vunpack.c.l.b16 %v24
  %v57 = vunpack.c.l.b16 %v25
  %v58 = vunpack.c.l.b16 %v26
  %v59 = vunpack.c.l.b16 %v27
  %v60 = vunpack.c.l.b16 %v28
  %v61 = vunpack.c.l.b16 %v29
  %v62 = vunpack.c.l.b16 %v30
  %v63 = vunpack.c.l.b16 %v31
  %v64 = vunpack.c.l.b16 %v32
  %v65 = vunpack.c.l.b16 %v33
  %v66 = vunpack.c.l.b16 %v34
  %v67 = vunpack.c.l.b16 %v35
  %v68 = vunpack.c.l.b16 %v36
  %v69 = vpack.c.b16 %v54, %v53
  %v70 = vpack.c.b16 %v56, %v55
  %v71 = vpack.c.b16 %v58, %v57
  %v72 = vpack.c.b16 %v60, %v59
  %v73 = vpack.c.b16 %v62, %v61
  %v74 = vpack.c.b16 %v64, %v63
  %v75 = vpack.c.b16 %v66, %v65
  %v76 = vpack.c.b16 %v68, %v67
  %85 = vmatpush.bf16.msra.mxu0 %v76
  %86 = vmatpush.bf16.msra.mxu0 %v75
  %87 = vmatpush.bf16.msra.mxu0 %v74
  %88 = vmatpush.bf16.msra.mxu0 %v73
  %89 = vmatpush.bf16.msra.mxu0 %v72
  %90 = vmatpush.bf16.msra.mxu0 %v71
  %91 = vmatpush.bf16.msra.mxu0 %v70
  %92 = vmatpush.bf16.msra.mxu0 %v69
  %93 = vmatmul.bf16.gmra.mxu0 %v20
  %v94 = vpop.f32.mrf.mxu0
  %v95 = vadd.f32 0.0, %v94
  %v96 = vpop.f32.mrf.mxu0
  %97 = vdwg.mxu0
  %v98 = vadd.f32 %v19, %v95
  %99 = vst [vmem:[#allocation2] sm:$0xff] %v98
  // Predicated region
  $region18: #{bert_for_pretraining.35} parent=0 // pred_check
    %p100 = pneg %p14
  $region19: #{bert_for_pretraining.35} parent=0 // pred_check_branch
    %102 = sbr.rel (%p100) target = $region21
  $region20: #{bert_for_pretraining.35} parent=0 // pred_region
    %v103 = vld [vmem:[#allocation2] sm:$0xff]
    %v104 = vld [vmem:[%s2] sm:$0x1]
    %v106 = vperm.slane %v104, 0
    %v108 = vadd.f32 %v103, %v106
    %v109 = vtanh.pop %v108
    %110 = vst [vmem:[%s3] sm:$0xff] %v109
  $region21: #{bert_for_pretraining.35} parent=0 // pred_fallthru
    _
  // Predicated region
  $region22: #{bert_for_pretraining.35} parent=0 // pred_check
    _
  $region23: #{bert_for_pretraining.35} parent=0 // pred_check_branch
    %112 = sbr.rel (0) target = $region25
  $region24: #{bert_for_pretraining.35} parent=0 // pred_region
    _
  $region25: #{bert_for_pretraining.35} parent=0 // pred_fallthru
    _
  // Predicated region
  $region26: #{bert_for_pretraining.35} parent=0 // pred_check
    _
  $region27: #{bert_for_pretraining.35} parent=0 // pred_check_branch
    %114 = sbr.rel (0) target = $region29
  $region28: #{bert_for_pretraining.35} parent=0 // pred_region
    _
  $region29: #{bert_for_pretraining.35} parent=0 // pred_fallthru
    _

// kernel: bert_for_pretraining.37
$region0: #{bert_for_pretraining.37}
  #allocation0 [shape = 'u32[]', space=smem, size = 0x4, offset = 0x4, fixed_abs, tag = 'smem constant byte address 0x4 - core index']
  #allocation1 [shape = 'u32[72,128]{1,0:T(1,128)}', space=vmem, size = 0x9000, scoped, tag = 'internal scratch']
  %s0 = inlined_call_operand.vmem [shape: bf16[16,64], index: 0, kind: input, shape index: {}]
  %s1 = inlined_call_operand.vmem [shape: f32[1,64], index: 1, kind: input, shape index: {}]
  %s2 = inlined_call_operand.vmem [shape: f32[1,64], index: 2, kind: input, shape index: {}]
  %s3 = inlined_call_operand.vmem [shape: bf16[16,64], index: 3, kind: output, shape index: {}]
  %s4 = sld [smem:[#allocation0]]
  $region22: #{bert_for_pretraining.37} parent=0
    _
  %s6 = ssub.s32 1, %s4
  %s7 = scalar_select 0, %s6, %s4
  // Predicated region
  $region2: #{bert_for_pretraining.37} parent=0 // pred_check
    _
  $region3: #{bert_for_pretraining.37} parent=0 // pred_check_branch
    %9 = sbr.rel (0) target = $region5
  $region4: #{bert_for_pretraining.37} parent=0 // pred_region
    _
  $region5: #{bert_for_pretraining.37} parent=0 // pred_fallthru
    _
  // Predicated region
  $region6: #{bert_for_pretraining.37} parent=0 // pred_check
    _
  $region7: #{bert_for_pretraining.37} parent=0 // pred_check_branch
    %11 = sbr.rel (0) target = $region9
  $region8: #{bert_for_pretraining.37} parent=0 // pred_region
    _
  $region9: #{bert_for_pretraining.37} parent=0 // pred_fallthru
    _
  // Predicated region
  $region10: #{bert_for_pretraining.37} parent=0 // pred_check
    _
  $region11: #{bert_for_pretraining.37} parent=0 // pred_check_branch
    %13 = sbr.rel (0) target = $region13
  $region12: #{bert_for_pretraining.37} parent=0 // pred_region
    _
  $region13: #{bert_for_pretraining.37} parent=0 // pred_fallthru
    _
  %v14 = vld [vmem:[%s0] sm:$0xf]
  %v15 = vld [vmem:[%s0 + $0x4] sm:$0xf]
  %v16 = vunpack.c.l.bf16 %v14
  %v17 = vunpack.c.l.bf16 %v15
  %vm18 = vcmask 523264
  %v19 = vsel %vm18, %v16, 0.0
  %20 = vadd.xlane.f32.xlu0 %v19
  %v21 = vpop.xlane.xlu0 %20
  %v22 = vsel %vm18, %v17, 0.0
  %23 = vadd.xlane.f32.xlu0 %v22
  %v24 = vpop.xlane.xlu0 %23
  %v25 = vrcp.pop 64.0
  %v26 = vmul.f32 64.0, %v25
  %v27 = vsub.f32 1.0, %v26
  %v28 = vmul.f32 %v25, %v27
  %v29 = vadd.f32 %v25, %v28
  %vm30 = vweird.f32 %v25
  %v31 = vsel %vm30, %v25, %v29
  %v32 = vmul.f32 %v21, %v31
  %v33 = vmul.f32 %v24, %v31
  %v34 = vsub.f32 %v16, %v32
  %v35 = vsub.f32 %v17, %v33
  %v36 = vmul.f32 %v34, %v34
  %v37 = vmul.f32 %v35, %v35
  %v38 = vsel %vm18, %v36, 0.0
  %39 = vadd.xlane.f32.xlu0 %v38
  %v40 = vpop.xlane.xlu0 %39
  %v41 = vsel %vm18, %v37, 0.0
  %42 = vadd.xlane.f32.xlu0 %v41
  %v43 = vpop.xlane.xlu0 %42
  %v44 = vmul.f32 %v40, %v31
  %v45 = vmul.f32 %v43, %v31
  %v46 = vadd.f32 %v44, 1e-12
  %v47 = vadd.f32 %v45, 1e-12
  %v48 = vrsqrt.pop %v46
  %v49 = vmul.f32 %v48, %v46
  %v50 = vmul.f32 %v49, %v48
  %v51 = vmul.f32 0.5, %v50
  %v52 = vsub.f32 1.5, %v51
  %v53 = vmul.f32 %v48, %v52
  %vm54 = vweird.f32 %v46
  %vm55 = vweird.f32 %v48
  %vm56 = vmor %vm54, %vm55
  %v57 = vsel %vm56, %v48, %v53
  %v58 = vrsqrt.pop %v47
  %v59 = vmul.f32 %v58, %v47
  %v60 = vmul.f32 %v59, %v58
  %v61 = vmul.f32 0.5, %v60
  %v62 = vsub.f32 1.5, %v61
  %v63 = vmul.f32 %v58, %v62
  %vm64 = vweird.f32 %v47
  %vm65 = vweird.f32 %v58
  %vm66 = vmor %vm64, %vm65
  %v67 = vsel %vm66, %v58, %v63
  %v68 = vmul.f32 %v34, %v57
  %v69 = vmul.f32 %v35, %v67
  %v70 = vld [vmem:[%s1] sm:$0x1]
  %v72 = vperm.slane %v70, 0
  %v74 = vmul.f32 %v68, %v72
  %v75 = vmul.f32 %v69, %v72
  %v76 = vld [vmem:[%s2] sm:$0x1]
  %v78 = vperm.slane %v76, 0
  %v80 = vadd.f32 %v74, %v78
  %v81 = vadd.f32 %v75, %v78
  %v82 = vpack.c.bf16 %v80, %v80
  %v83 = vpack.c.bf16 %v81, %v81
  %vm84 = vcmask 519168
  %85 = vst.msk [vmem:[%s3] sm:$0xf] %vm84, %v82
  %86 = vst.msk [vmem:[%s3 + $0x4] sm:$0xf] %vm84, %v83
  // Predicated region
  $region14: #{bert_for_pretraining.37} parent=0 // pred_check
    _
  $region15: #{bert_for_pretraining.37} parent=0 // pred_check_branch
    %88 = sbr.rel (0) target = $region17
  $region16: #{bert_for_pretraining.37} parent=0 // pred_region
    _
  $region17: #{bert_for_pretraining.37} parent=0 // pred_fallthru
    _
  // Predicated region
  $region18: #{bert_for_pretraining.37} parent=0 // pred_check
    _
  $region19: #{bert_for_pretraining.37} parent=0 // pred_check_branch
    %90 = sbr.rel (0) target = $region21
  $region20: #{bert_for_pretraining.37} parent=0 // pred_region
    _
  $region21: #{bert_for_pretraining.37} parent=0 // pred_fallthru
    _

// kernel: bert_for_pretraining.39
$region0: #{bert_for_pretraining.39}
  #allocation0 [shape = 'u32[]', space=smem, size = 0x4, offset = 0x4, fixed_abs, tag = 'smem constant byte address 0x4 - core index']
  #allocation1 [shape = 'u32[72,128]{1,0:T(1,128)}', space=vmem, size = 0x9000, scoped, tag = 'internal scratch']
  #allocation2 [shape = 'f32[8,128]{1,0:T(8,128)}', space=vmem, size = 0x1000, scoped, tag = 'scratch operand']
  %s0 = inlined_call_operand.vmem [shape: bf16[8,128], index: 0, kind: input, shape index: {}]
  %s1 = inlined_call_operand.vmem [shape: bf16[128,128], index: 1, kind: input, shape index: {}]
  %s2 = inlined_call_operand.vmem [shape: f32[1,128], index: 2, kind: input, shape index: {}]
  %s3 = inlined_call_operand.vmem [shape: f32[8,128], index: 3, kind: output, shape index: {}]
  %s4 = sld [smem:[#allocation0]]
  $region30: #{bert_for_pretraining.39} parent=0
    _
  %s6 = ssub.s32 1, %s4
  %s7 = scalar_select 0, %s6, %s4
  // Predicated region
  $region2: #{bert_for_pretraining.39} parent=0 // pred_check
    _
  $region3: #{bert_for_pretraining.39} parent=0 // pred_check_branch
    %9 = sbr.rel (0) target = $region5
  $region4: #{bert_for_pretraining.39} parent=0 // pred_region
    _
  $region5: #{bert_for_pretraining.39} parent=0 // pred_fallthru
    _
  // Predicated region
  $region6: #{bert_for_pretraining.39} parent=0 // pred_check
    _
  $region7: #{bert_for_pretraining.39} parent=0 // pred_check_branch
    %11 = sbr.rel (0) target = $region9
  $region8: #{bert_for_pretraining.39} parent=0 // pred_region
    _
  $region9: #{bert_for_pretraining.39} parent=0 // pred_fallthru
    _
  // Predicated region
  $region10: #{bert_for_pretraining.39} parent=0 // pred_check
    _
  $region11: #{bert_for_pretraining.39} parent=0 // pred_check_branch
    %13 = sbr.rel (0) target = $region13
  $region12: #{bert_for_pretraining.39} parent=0 // pred_region
    _
  $region13: #{bert_for_pretraining.39} parent=0 // pred_fallthru
    _
  %p14 = scmp.eq.s32.totalorder 0, 0
  // Predicated region
  $region14: #{bert_for_pretraining.39} parent=0 // pred_check
    %p15 = pneg %p14
  $region15: #{bert_for_pretraining.39} parent=0 // pred_check_branch
    %17 = sbr.rel (%p15) target = $region17
  $region16: #{bert_for_pretraining.39} parent=0 // pred_region
    %18 = vst [vmem:[#allocation2] sm:$0xff] 0.0
  $region17: #{bert_for_pretraining.39} parent=0 // pred_fallthru
    _
  %v19 = vld [vmem:[#allocation2] sm:$0xff]
  %v20 = vld [vmem:[%s0] sm:$0xf]
  %v21 = vld [vmem:[%s1] sm:$0xf]
  %v22 = vld [vmem:[%s1 + $0x4] sm:$0xf]
  %v23 = vld [vmem:[%s1 + $0x8] sm:$0xf]
  %v24 = vld [vmem:[%s1 + $0xc] sm:$0xf]
  %v25 = vld [vmem:[%s1 + $0x10] sm:$0xf]
  %v26 = vld [vmem:[%s1 + $0x14] sm:$0xf]
  %v27 = vld [vmem:[%s1 + $0x18] sm:$0xf]
  %v28 = vld [vmem:[%s1 + $0x1c] sm:$0xf]
  %v29 = vld [vmem:[%s1 + $0x20] sm:$0xf]
  %v30 = vld [vmem:[%s1 + $0x24] sm:$0xf]
  %v31 = vld [vmem:[%s1 + $0x28] sm:$0xf]
  %v32 = vld [vmem:[%s1 + $0x2c] sm:$0xf]
  %v33 = vld [vmem:[%s1 + $0x30] sm:$0xf]
  %v34 = vld [vmem:[%s1 + $0x34] sm:$0xf]
  %v35 = vld [vmem:[%s1 + $0x38] sm:$0xf]
  %v36 = vld [vmem:[%s1 + $0x3c] sm:$0xf]
  %v53 = vunpack.c.l.b16 %v21
  %v54 = vunpack.c.l.b16 %v22
  %v55 = vunpack.c.l.b16 %v23
  %v56 = vunpack.c.l.b16 %v24
  %v57 = vunpack.c.l.b16 %v25
  %v58 = vunpack.c.l.b16 %v26
  %v59 = vunpack.c.l.b16 %v27
  %v60 = vunpack.c.l.b16 %v28
  %v61 = vunpack.c.l.b16 %v29
  %v62 = vunpack.c.l.b16 %v30
  %v63 = vunpack.c.l.b16 %v31
  %v64 = vunpack.c.l.b16 %v32
  %v65 = vunpack.c.l.b16 %v33
  %v66 = vunpack.c.l.b16 %v34
  %v67 = vunpack.c.l.b16 %v35
  %v68 = vunpack.c.l.b16 %v36
  %v69 = vpack.c.b16 %v54, %v53
  %v70 = vpack.c.b16 %v56, %v55
  %v71 = vpack.c.b16 %v58, %v57
  %v72 = vpack.c.b16 %v60, %v59
  %v73 = vpack.c.b16 %v62, %v61
  %v74 = vpack.c.b16 %v64, %v63
  %v75 = vpack.c.b16 %v66, %v65
  %v76 = vpack.c.b16 %v68, %v67
  %85 = vmatpush.bf16.msra.mxu0 %v76
  %86 = vmatpush.bf16.msra.mxu0 %v75
  %87 = vmatpush.bf16.msra.mxu0 %v74
  %88 = vmatpush.bf16.msra.mxu0 %v73
  %89 = vmatpush.bf16.msra.mxu0 %v72
  %90 = vmatpush.bf16.msra.mxu0 %v71
  %91 = vmatpush.bf16.msra.mxu0 %v70
  %92 = vmatpush.bf16.msra.mxu0 %v69
  %93 = vmatmul.bf16.gmra.mxu0 %v20
  %v94 = vpop.f32.mrf.mxu0
  %v95 = vadd.f32 0.0, %v94
  %v96 = vpop.f32.mrf.mxu0
  %97 = vdwg.mxu0
  %v98 = vadd.f32 %v19, %v95
  %99 = vst [vmem:[#allocation2] sm:$0xff] %v98
  // Predicated region
  $region18: #{bert_for_pretraining.39} parent=0 // pred_check
    %p100 = pneg %p14
  $region19: #{bert_for_pretraining.39} parent=0 // pred_check_branch
    %102 = sbr.rel (%p100) target = $region21
  $region20: #{bert_for_pretraining.39} parent=0 // pred_region
    %v103 = vld [vmem:[#allocation2] sm:$0xff]
    %v104 = vld [vmem:[%s2] sm:$0x1]
    %v106 = vperm.slane %v104, 0
    %v108 = vadd.f32 %v103, %v106
    %109 = vst [vmem:[%s3] sm:$0xff] %v108
  $region21: #{bert_for_pretraining.39} parent=0 // pred_fallthru
    _
  // Predicated region
  $region22: #{bert_for_pretraining.39} parent=0 // pred_check
    _
  $region23: #{bert_for_pretraining.39} parent=0 // pred_check_branch
    %111 = sbr.rel (0) target = $region25
  $region24: #{bert_for_pretraining.39} parent=0 // pred_region
    _
  $region25: #{bert_for_pretraining.39} parent=0 // pred_fallthru
    _
  // Predicated region
  $region26: #{bert_for_pretraining.39} parent=0 // pred_check
    _
  $region27: #{bert_for_pretraining.39} parent=0 // pred_check_branch
    %113 = sbr.rel (0) target = $region29
  $region28: #{bert_for_pretraining.39} parent=0 // pred_region
    _
  $region29: #{bert_for_pretraining.39} parent=0 // pred_fallthru
    _

// kernel: bert_for_pretraining.38
$region0: #{bert_for_pretraining.38}
  #allocation0 [shape = 'u32[]', space=smem, size = 0x4, offset = 0x4, fixed_abs, tag = 'smem constant byte address 0x4 - core index']
  #allocation1 [shape = 'u32[72,128]{1,0:T(1,128)}', space=vmem, size = 0x9000, scoped, tag = 'internal scratch']
  #allocation2 [shape = 'f32[16,128]{1,0:T(8,128)}', space=vmem, size = 0x2000, scoped, tag = 'scratch operand']
  %s0 = inlined_call_operand.vmem [shape: bf16[16,128], index: 0, kind: input, shape index: {}]
  %s1 = inlined_call_operand.vmem [shape: bf16[128,128], index: 1, kind: input, shape index: {}]
  %s2 = inlined_call_operand.vmem [shape: f32[1,128], index: 2, kind: input, shape index: {}]
  %s3 = inlined_call_operand.hbm [shape: f32[16,128], index: 3, kind: output, shape index: {}]
  %s4 = sld [smem:[#allocation0]]
  $region30: #{bert_for_pretraining.38} parent=0
    _
  %s6 = ssub.s32 1, %s4
  %s7 = scalar_select 0, %s6, %s4
  $region1: #{bert_for_pretraining.38} parent=0
    #allocation3 [shape = 'u8[8192]{0}', space=vmem, size = 0x2000, scoped, tag = 'output window, operand 0, single buffered']
    #allocation4 [shape = 's32[1]{0}', space=sflag, size = 0x4, scoped, tag = 'scoped memory for bert_for_pretraining.38']
    %8 = vsyncpa [#allocation4], 0
    // Predicated region
    $region2: #{bert_for_pretraining.38} parent=1 // pred_check
      _
    $region3: #{bert_for_pretraining.38} parent=1 // pred_check_branch
      %10 = sbr.rel (0) target = $region5
    $region4: #{bert_for_pretraining.38} parent=1 // pred_region
      _
    $region5: #{bert_for_pretraining.38} parent=1 // pred_fallthru
      _
    // Predicated region
    $region6: #{bert_for_pretraining.38} parent=1 // pred_check
      _
    $region7: #{bert_for_pretraining.38} parent=1 // pred_check_branch
      %12 = sbr.rel (0) target = $region9
    $region8: #{bert_for_pretraining.38} parent=1 // pred_region
      _
    $region9: #{bert_for_pretraining.38} parent=1 // pred_fallthru
      _
    // Predicated region
    $region10: #{bert_for_pretraining.38} parent=1 // pred_check
      _
    $region11: #{bert_for_pretraining.38} parent=1 // pred_check_branch
      %14 = sbr.rel (0) target = $region13
    $region12: #{bert_for_pretraining.38} parent=1 // pred_region
      _
    $region13: #{bert_for_pretraining.38} parent=1 // pred_fallthru
      _
    %p15 = scmp.eq.s32.totalorder 0, 0
    // Predicated region
    $region14: #{bert_for_pretraining.38} parent=1 // pred_check
      %p16 = pneg %p15
    $region15: #{bert_for_pretraining.38} parent=1 // pred_check_branch
      %18 = sbr.rel (%p16) target = $region17
    $region16: #{bert_for_pretraining.38} parent=1 // pred_region
      %19 = vst [vmem:[#allocation2] sm:$0xff] 0.0
      %20 = vst [vmem:[#allocation2 + $0x8] sm:$0xff] 0.0
    $region17: #{bert_for_pretraining.38} parent=1 // pred_fallthru
      _
    %v21 = vld [vmem:[#allocation2] sm:$0xff]
    %v22 = vld [vmem:[#allocation2 + $0x8] sm:$0xff]
    %v23 = vld [vmem:[%s0] sm:$0xf]
    %v24 = vld [vmem:[%s0 + $0x4] sm:$0xf]
    %v25 = vld [vmem:[%s1] sm:$0xf]
    %v26 = vld [vmem:[%s1 + $0x4] sm:$0xf]
    %v27 = vld [vmem:[%s1 + $0x8] sm:$0xf]
    %v28 = vld [vmem:[%s1 + $0xc] sm:$0xf]
    %v29 = vld [vmem:[%s1 + $0x10] sm:$0xf]
    %v30 = vld [vmem:[%s1 + $0x14] sm:$0xf]
    %v31 = vld [vmem:[%s1 + $0x18] sm:$0xf]
    %v32 = vld [vmem:[%s1 + $0x1c] sm:$0xf]
    %v33 = vld [vmem:[%s1 + $0x20] sm:$0xf]
    %v34 = vld [vmem:[%s1 + $0x24] sm:$0xf]
    %v35 = vld [vmem:[%s1 + $0x28] sm:$0xf]
    %v36 = vld [vmem:[%s1 + $0x2c] sm:$0xf]
    %v37 = vld [vmem:[%s1 + $0x30] sm:$0xf]
    %v38 = vld [vmem:[%s1 + $0x34] sm:$0xf]
    %v39 = vld [vmem:[%s1 + $0x38] sm:$0xf]
    %v40 = vld [vmem:[%s1 + $0x3c] sm:$0xf]
    %v43 = vunpack.c.l.b16 %v23
    %v44 = vunpack.c.l.b16 %v24
    %v45 = vpack.c.b16 %v44, %v43
    %v63 = vunpack.c.l.b16 %v25
    %v64 = vunpack.c.l.b16 %v26
    %v65 = vunpack.c.l.b16 %v27
    %v66 = vunpack.c.l.b16 %v28
    %v67 = vunpack.c.l.b16 %v29
    %v68 = vunpack.c.l.b16 %v30
    %v69 = vunpack.c.l.b16 %v31
    %v70 = vunpack.c.l.b16 %v32
    %v71 = vunpack.c.l.b16 %v33
    %v72 = vunpack.c.l.b16 %v34
    %v73 = vunpack.c.l.b16 %v35
    %v74 = vunpack.c.l.b16 %v36
    %v75 = vunpack.c.l.b16 %v37
    %v76 = vunpack.c.l.b16 %v38
    %v77 = vunpack.c.l.b16 %v39
    %v78 = vunpack.c.l.b16 %v40
    %v79 = vpack.c.b16 %v64, %v63
    %v80 = vpack.c.b16 %v66, %v65
    %v81 = vpack.c.b16 %v68, %v67
    %v82 = vpack.c.b16 %v70, %v69
    %v83 = vpack.c.b16 %v72, %v71
    %v84 = vpack.c.b16 %v74, %v73
    %v85 = vpack.c.b16 %v76, %v75
    %v86 = vpack.c.b16 %v78, %v77
    %95 = vmatpush.bf16.msra.mxu0 %v86
    %96 = vmatpush.bf16.msra.mxu0 %v85
    %97 = vmatpush.bf16.msra.mxu0 %v84
    %98 = vmatpush.bf16.msra.mxu0 %v83
    %99 = vmatpush.bf16.msra.mxu0 %v82
    %100 = vmatpush.bf16.msra.mxu0 %v81
    %101 = vmatpush.bf16.msra.mxu0 %v80
    %102 = vmatpush.bf16.msra.mxu0 %v79
    %103 = vmatmul.bf16.gmra.mxu0 %v45
    %v104 = vpop.f32.mrf.mxu0
    %v105 = vadd.f32 0.0, %v104
    %v106 = vpop.f32.mrf.mxu0
    %v107 = vadd.f32 0.0, %v106
    %108 = vdwg.mxu0
    %v109 = vadd.f32 %v21, %v105
    %v110 = vadd.f32 %v22, %v107
    %111 = vst [vmem:[#allocation2] sm:$0xff] %v109
    %112 = vst [vmem:[#allocation2 + $0x8] sm:$0xff] %v110
    // Predicated region
    $region18: #{bert_for_pretraining.38} parent=1 // pred_check
      %p113 = pneg %p15
    $region19: #{bert_for_pretraining.38} parent=1 // pred_check_branch
      %115 = sbr.rel (%p113) target = $region21
    $region20: #{bert_for_pretraining.38} parent=1 // pred_region
      %v116 = vld [vmem:[#allocation2] sm:$0xff]
      %v117 = vld [vmem:[#allocation2 + $0x8] sm:$0xff]
      %v118 = vld [vmem:[%s2] sm:$0x1]
      %v120 = vperm.slane %v118, 0
      %v122 = vadd.f32 %v116, %v120
      %v123 = vadd.f32 %v117, %v120
      %124 = vst [vmem:[#allocation3] sm:$0xff] %v122
      %125 = vst [vmem:[#allocation3 + $0x8] sm:$0xff] %v123
    $region21: #{bert_for_pretraining.38} parent=1 // pred_fallthru
      _
    // Predicated region
    $region22: #{bert_for_pretraining.38} parent=1 // pred_check
      _
    $region23: #{bert_for_pretraining.38} parent=1 // pred_check_branch
      %127 = sbr.rel (0) target = $region25
    $region24: #{bert_for_pretraining.38} parent=1 // pred_region
      %129 = vsyncadd [#allocation4], 0
      %s130 = sshll.u32 [#allocation3], 4
      %s131 = int_to_ptr.vmem [resolvable:$true] %s130
      %s132 = sshll.u32 %s3, 4
      %s133 = int_to_ptr.hbm [resolvable:$true] %s132
      %138 = dma.vmem_to_hbm [thread:$0]  %s131, 256, %s133, [#allocation4], 128, 128, 8
    $region25: #{bert_for_pretraining.38} parent=1 // pred_fallthru
      _
    // Predicated region
    $region26: #{bert_for_pretraining.38} parent=1 // pred_check
      _
    $region27: #{bert_for_pretraining.38} parent=1 // pred_check_branch
      %140 = sbr.rel (0) target = $region29
    $region28: #{bert_for_pretraining.38} parent=1 // pred_region
      %142 = dma.done [#allocation4], 256
    $region29: #{bert_for_pretraining.38} parent=1 // pred_fallthru
      _
    %143 = vsyncpa [#allocation4], 1

</llo_original>
